<compile_context>
chip_gen: v7x
topology: tpu7x:2x2x1
jax: 0.10.0
libtpu: 0.0.40
codegen_flags: <defaults>
</compile_context>

<pallas_src>
import math
from functools import partial

import jax
import jax.numpy as jnp
from jax.experimental import pallas as pl
from jax.experimental.pallas import tpu as pltpu  # noqa: F401  (TPU backend)


# ----------------------------- in-kernel helpers -----------------------------

def _layernorm_torch(x, a, b, eps=1e-6):
    # torch: mean over last dim, unbiased std (N-1), divide by (std + eps)
    d = x.shape[-1]
    mean = jnp.mean(x, axis=-1, keepdims=True)
    diff = x - mean
    var = jnp.sum(diff * diff, axis=-1, keepdims=True) * (1.0 / (d - 1))
    std = jnp.sqrt(var)
    inv = pl.reciprocal(std + eps, approx=True)
    return a * diff * inv + b


def _gelu_tanh(x):
    return 0.5 * x * (1.0 + jnp.tanh(math.sqrt(2.0 / math.pi)
                                     * (x + 0.044715 * x * x * x)))


# ----------------------------- fused encoder kernel --------------------------

def context_encoder_kernel(x_ref, mask_ref,
                           ln1a_ref, ln1b_ref, wqkv_ref, bqkv_ref,
                           wo_ref, bo_ref, ln2a_ref, ln2b_ref,
                           w1_ref, b1_ref, w2_ref, b2_ref,
                           out_ref, *, n_layers, n_heads, d_k):
    x = x_ref[...]                      # (BT, D) f32 activations
    m = mask_ref[...]                   # (BT, BT) mask bias: 0 keep, -1e9 pad key,
                                        #                    -inf cross-sequence
    D = x.shape[1]
    scale = 1.0 / math.sqrt(d_k)

    for l in range(n_layers):           # static loop over fused layers
        # ---- sublayer 1: pre-norm multi-head self-attention + residual ----
        xn = _layernorm_torch(x, ln1a_ref[l], ln1b_ref[l])
        qkv = jnp.dot(xn.astype(jnp.bfloat16), wqkv_ref[l],
                      preferred_element_type=jnp.float32) + bqkv_ref[l]
        q = qkv[:, 0 * D:1 * D]
        k = qkv[:, 1 * D:2 * D]
        v = qkv[:, 2 * D:3 * D]

        heads = []
        for h in range(n_heads):        # static loop over heads
            lo, hi = h * d_k, (h + 1) * d_k
            qh = q[:, lo:hi].astype(jnp.bfloat16)
            kh = k[:, lo:hi].astype(jnp.bfloat16)
            vh = v[:, lo:hi].astype(jnp.bfloat16)
            # scores for all B*T rows at once (q @ k^T via trans-B dot_general)
            s = jax.lax.dot_general(qh, kh, (((1,), (1,)), ((), ())),
                                    preferred_element_type=jnp.float32)
            s = s * scale
            s = jnp.where(m == 0.0, s, m)            # padded key / cross-batch
            s = s - jnp.max(s, axis=-1, keepdims=True)
            p = jnp.exp(s)
            p = p * pl.reciprocal(jnp.sum(p, axis=-1, keepdims=True),
                                  approx=True)
            heads.append(jnp.dot(p.astype(jnp.bfloat16), vh,
                                 preferred_element_type=jnp.float32))
        attn = jnp.concatenate(heads, axis=-1).astype(jnp.bfloat16)   # (BT, D)
        attn = jnp.dot(attn, wo_ref[l],
                       preferred_element_type=jnp.float32) + bo_ref[l]
        x = x + attn                    # dropout == identity (eval)

        # ---- sublayer 2: pre-norm positionwise FFN + residual ----
        xn2 = _layernorm_torch(x, ln2a_ref[l], ln2b_ref[l])
        h1 = _gelu_tanh(jnp.dot(xn2.astype(jnp.bfloat16), w1_ref[l],
                                preferred_element_type=jnp.float32) + b1_ref[l])
        ff = jnp.dot(h1.astype(jnp.bfloat16), w2_ref[l],
                     preferred_element_type=jnp.float32) + b2_ref[l]
        x = x + ff

    out_ref[...] = x


# ----------------------------- plain-JAX glue ---------------------------------

def positional_embedding(T, D):
    position = jnp.arange(T, dtype=jnp.float32)[:, None]
    div_term = jnp.exp(jnp.arange(0, D, 2, dtype=jnp.float32)
                       * -(math.log(10000.0) / D))
    pe = jnp.zeros((T, D), jnp.float32)
    pe = pe.at[:, 0::2].set(jnp.sin(position * div_term))
    pe = pe.at[:, 1::2].set(jnp.cos(position * div_term))
    return pe


def init_stacked_params(key, n_layers, D, Dff):
    """Per-layer params stacked along a leading L axis; matmul weights in bf16."""
    def one_layer(k):
        ks = jax.random.split(k, 6)
        n = lambda kk, sh: (0.02 * jax.random.normal(kk, sh)).astype(jnp.float32)
        wq, wk, wv = n(ks[0], (D, D)), n(ks[1], (D, D)), n(ks[2], (D, D))
        return {
            'ln1a': jnp.ones((1, D), jnp.float32),
            'ln1b': jnp.zeros((1, D), jnp.float32),
            'wqkv': jnp.concatenate([wq, wk, wv], axis=1),      # (D, 3D)
            'bqkv': jnp.zeros((1, 3 * D), jnp.float32),
            'wo': n(ks[3], (D, D)), 'bo': jnp.zeros((1, D), jnp.float32),
            'ln2a': jnp.ones((1, D), jnp.float32),
            'ln2b': jnp.zeros((1, D), jnp.float32),
            'w1': n(ks[4], (D, Dff)), 'b1': jnp.zeros((1, Dff), jnp.float32),
            'w2': n(ks[5], (Dff, D)), 'b2': jnp.zeros((1, D), jnp.float32),
        }
    per = [one_layer(k) for k in jax.random.split(key, n_layers)]
    stacked = {k: jnp.stack([p[k] for p in per], axis=0) for k in per[0]}
    for k in ('wqkv', 'wo', 'w1', 'w2'):        # MXU-native bf16 weight storage
        stacked[k] = stacked[k].astype(jnp.bfloat16)
    return stacked


def context_encoder_forward(tokens, emb_table, params, *, n_heads):
    B, T = tokens.shape
    D = emb_table.shape[1]
    L = params['wqkv'].shape[0]
    d_k = D // n_heads
    BT = B * T

    # WordEmbedding: token lookup + sinusoidal PE (dropout == identity).
    # The gather stays in plain JAX (done once); everything else is fused.
    x0 = (emb_table[tokens] + positional_embedding(T, D)[None]).astype(jnp.float32)
    x0 = x0.reshape(BT, D)

    # Block-diagonal attention mask bias, computed once:
    #   0.0  -> keep score
    #   -1e9 -> padded key within the same sequence (matches masked_fill(-1e9))
    #   -inf -> key from a different sequence (exactly excluded)
    key_valid = tokens.reshape(BT) > 0
    rows = jnp.arange(BT) // T
    same_seq = rows[:, None] == rows[None, :]
    mask = jnp.where(same_seq & key_valid[None, :], 0.0,
                     jnp.where(same_seq, -1e9, -jnp.inf)).astype(jnp.float32)

    flat = [params[k] for k in ('ln1a', 'ln1b', 'wqkv', 'bqkv', 'wo', 'bo',
                                'ln2a', 'ln2b', 'w1', 'b1', 'w2', 'b2')]

    out = pl.pallas_call(
        partial(context_encoder_kernel, n_layers=L, n_heads=n_heads, d_k=d_k),
        out_shape=jax.ShapeDtypeStruct((BT, D), jnp.float32),
    )(x0, mask, *flat)
    return out.reshape(B, T, D)


# ----------------------------- main -------------------------------------------

if __name__ == "__main__":
    vocab_size = 50
    hidden = 32
    n_layers = 2
    attn_heads = 4
    B, T = 2, 8
    ff_hidden = hidden * 4

    key = jax.random.PRNGKey(0)
    k_tok, k_emb, k_layers = jax.random.split(key, 3)

    tokens = jax.random.randint(k_tok, (B, T), 1, vocab_size, dtype=jnp.int32)
    tokens = tokens.at[1, 6:].set(0)  # padding tokens -> exercise the mask

    emb_table = (0.02 * jax.random.normal(k_emb, (vocab_size, hidden))
                 ).astype(jnp.float32)
    params = init_stacked_params(k_layers, n_layers, hidden, ff_hidden)

    fwd = jax.jit(partial(context_encoder_forward, n_heads=attn_heads))
    out = fwd(tokens, emb_table, params)
    jax.block_until_ready(out)
    assert out.shape == (B, T, hidden)
    assert bool(jnp.all(jnp.isfinite(out)))
    print("KERNEL_OK")
</pallas_src>

<mosaic_0001>
module attributes {stable_mosaic.version = 11 : i64} {
  func.func @context_encoder_kernel(%arg0: memref<16x32xf32, #tpu.memory_space<vmem>>, %arg1: memref<16x16xf32, #tpu.memory_space<vmem>>, %arg2: memref<2x1x32xf32, #tpu.memory_space<vmem>>, %arg3: memref<2x1x32xf32, #tpu.memory_space<vmem>>, %arg4: memref<2x32x96xbf16, #tpu.memory_space<vmem>>, %arg5: memref<2x1x96xf32, #tpu.memory_space<vmem>>, %arg6: memref<2x32x32xbf16, #tpu.memory_space<vmem>>, %arg7: memref<2x1x32xf32, #tpu.memory_space<vmem>>, %arg8: memref<2x1x32xf32, #tpu.memory_space<vmem>>, %arg9: memref<2x1x32xf32, #tpu.memory_space<vmem>>, %arg10: memref<2x32x128xbf16, #tpu.memory_space<vmem>>, %arg11: memref<2x1x128xf32, #tpu.memory_space<vmem>>, %arg12: memref<2x128x32xbf16, #tpu.memory_space<vmem>>, %arg13: memref<2x1x32xf32, #tpu.memory_space<vmem>>, %arg14: memref<16x32xf32, #tpu.memory_space<vmem>>) attributes {dimension_semantics = [], scalar_prefetch = 0 : i64, scratch_operands = 0 : i64, tpu.core_type = #tpu.core_type<tc>} {
    %c0 = arith.constant 0 : index
    %c0_0 = arith.constant 0 : index
    %0 = vector.load %arg0[%c0, %c0_0] : memref<16x32xf32, #tpu.memory_space<vmem>>, vector<16x32xf32>
    %c0_1 = arith.constant 0 : index
    %c0_2 = arith.constant 0 : index
    %1 = vector.load %arg1[%c0_1, %c0_2] : memref<16x16xf32, #tpu.memory_space<vmem>>, vector<16x16xf32>
    %c0_3 = arith.constant 0 : index
    %c0_4 = arith.constant 0 : index
    %c0_5 = arith.constant 0 : index
    %2 = vector.load %arg2[%c0_3, %c0_4, %c0_5] : memref<2x1x32xf32, #tpu.memory_space<vmem>>, vector<1x1x32xf32>
    %3 = vector.shape_cast %2 : vector<1x1x32xf32> to vector<1x32xf32>
    %c0_6 = arith.constant 0 : index
    %c0_7 = arith.constant 0 : index
    %c0_8 = arith.constant 0 : index
    %4 = vector.load %arg3[%c0_6, %c0_7, %c0_8] : memref<2x1x32xf32, #tpu.memory_space<vmem>>, vector<1x1x32xf32>
    %5 = vector.shape_cast %4 : vector<1x1x32xf32> to vector<1x32xf32>
    %cst = arith.constant dense<0.000000e+00> : vector<16xf32>
    %6 = vector.multi_reduction <add>, %0, %cst [1] : vector<16x32xf32> to vector<16xf32>
    %7 = vector.shape_cast %6 : vector<16xf32> to vector<16x1xf32>
    %cst_9 = arith.constant 3.200000e+01 : f32
    %8 = vector.broadcast %cst_9 : f32 to vector<16x1xf32>
    %9 = arith.divf %7, %8 : vector<16x1xf32>
    %10 = vector.broadcast %9 : vector<16x1xf32> to vector<16x32xf32>
    %11 = arith.subf %0, %10 : vector<16x32xf32>
    %12 = arith.mulf %11, %11 : vector<16x32xf32>
    %cst_10 = arith.constant dense<0.000000e+00> : vector<16xf32>
    %13 = vector.multi_reduction <add>, %12, %cst_10 [1] : vector<16x32xf32> to vector<16xf32>
    %14 = vector.shape_cast %13 : vector<16xf32> to vector<16x1xf32>
    %cst_11 = arith.constant 0.0322580636 : f32
    %15 = vector.broadcast %cst_11 : f32 to vector<16x1xf32>
    %16 = arith.mulf %14, %15 : vector<16x1xf32>
    %17 = math.sqrt %16 : vector<16x1xf32>
    %cst_12 = arith.constant 9.99999997E-7 : f32
    %18 = vector.broadcast %cst_12 : f32 to vector<16x1xf32>
    %19 = arith.addf %17, %18 : vector<16x1xf32>
    %20 = tpu.reciprocal %19 {approx = true} : vector<16x1xf32> -> vector<16x1xf32>
    %21 = vector.broadcast %3 : vector<1x32xf32> to vector<16x32xf32>
    %22 = arith.mulf %21, %11 : vector<16x32xf32>
    %23 = vector.broadcast %20 : vector<16x1xf32> to vector<16x32xf32>
    %24 = arith.mulf %22, %23 : vector<16x32xf32>
    %25 = vector.broadcast %5 : vector<1x32xf32> to vector<16x32xf32>
    %26 = arith.addf %24, %25 : vector<16x32xf32>
    %27 = arith.truncf %26 : vector<16x32xf32> to vector<16x32xbf16>
    %c0_13 = arith.constant 0 : index
    %c0_14 = arith.constant 0 : index
    %c0_15 = arith.constant 0 : index
    %28 = vector.load %arg4[%c0_13, %c0_14, %c0_15] : memref<2x32x96xbf16, #tpu.memory_space<vmem>>, vector<1x32x96xbf16>
    %29 = vector.shape_cast %28 : vector<1x32x96xbf16> to vector<32x96xbf16>
    %cst_16 = arith.constant dense<0.000000e+00> : vector<16x96xf32>
    %30 = tpu.matmul %27, %29, %cst_16 {dimension_numbers = #tpu.dot_dimension_numbers<[1], [0], [0], [1], [0, 0, 1, 1], [], []>} : vector<16x32xbf16>, vector<32x96xbf16>, vector<16x96xf32> -> vector<16x96xf32>
    %c0_17 = arith.constant 0 : index
    %c0_18 = arith.constant 0 : index
    %c0_19 = arith.constant 0 : index
    %31 = vector.load %arg5[%c0_17, %c0_18, %c0_19] : memref<2x1x96xf32, #tpu.memory_space<vmem>>, vector<1x1x96xf32>
    %32 = vector.shape_cast %31 : vector<1x1x96xf32> to vector<1x96xf32>
    %33 = vector.broadcast %32 : vector<1x96xf32> to vector<16x96xf32>
    %34 = arith.addf %30, %33 : vector<16x96xf32>
    %35 = vector.extract_strided_slice %34 {offsets = [0, 0], sizes = [16, 32], strides = [1, 1]} : vector<16x96xf32> to vector<16x32xf32>
    %36 = vector.extract_strided_slice %34 {offsets = [0, 32], sizes = [16, 32], strides = [1, 1]} : vector<16x96xf32> to vector<16x32xf32>
    %37 = vector.extract_strided_slice %34 {offsets = [0, 64], sizes = [16, 32], strides = [1, 1]} : vector<16x96xf32> to vector<16x32xf32>
    %38 = vector.extract_strided_slice %35 {offsets = [0, 0], sizes = [16, 8], strides = [1, 1]} : vector<16x32xf32> to vector<16x8xf32>
    %39 = arith.truncf %38 : vector<16x8xf32> to vector<16x8xbf16>
    %40 = vector.extract_strided_slice %36 {offsets = [0, 0], sizes = [16, 8], strides = [1, 1]} : vector<16x32xf32> to vector<16x8xf32>
    %41 = arith.truncf %40 : vector<16x8xf32> to vector<16x8xbf16>
    %42 = vector.extract_strided_slice %37 {offsets = [0, 0], sizes = [16, 8], strides = [1, 1]} : vector<16x32xf32> to vector<16x8xf32>
    %43 = arith.truncf %42 : vector<16x8xf32> to vector<16x8xbf16>
    %cst_20 = arith.constant dense<0.000000e+00> : vector<16x16xf32>
    %44 = tpu.matmul %39, %41, %cst_20 {dimension_numbers = #tpu.dot_dimension_numbers<[1], [1], [0], [0], [0, 0, 1, 0], [], []>} : vector<16x8xbf16>, vector<16x8xbf16>, vector<16x16xf32> -> vector<16x16xf32>
    %cst_21 = arith.constant 0.353553385 : f32
    %45 = vector.broadcast %cst_21 : f32 to vector<16x16xf32>
    %46 = arith.mulf %44, %45 : vector<16x16xf32>
    %cst_22 = arith.constant 0.000000e+00 : f32
    %47 = vector.broadcast %cst_22 : f32 to vector<16x16xf32>
    %48 = arith.cmpf oeq, %1, %47 : vector<16x16xf32>
    %49 = arith.select %48, %46, %1 : vector<16x16xi1>, vector<16x16xf32>
    %cst_23 = arith.constant dense<0xFF800000> : vector<16xf32>
    %50 = vector.multi_reduction <maximumf>, %49, %cst_23 [1] : vector<16x16xf32> to vector<16xf32>
    %51 = vector.shape_cast %50 : vector<16xf32> to vector<16x1xf32>
    %52 = vector.broadcast %51 : vector<16x1xf32> to vector<16x16xf32>
    %53 = arith.subf %49, %52 : vector<16x16xf32>
    %54 = math.exp %53 : vector<16x16xf32>
    %cst_24 = arith.constant dense<0.000000e+00> : vector<16xf32>
    %55 = vector.multi_reduction <add>, %54, %cst_24 [1] : vector<16x16xf32> to vector<16xf32>
    %56 = vector.shape_cast %55 : vector<16xf32> to vector<16x1xf32>
    %57 = tpu.reciprocal %56 {approx = true} : vector<16x1xf32> -> vector<16x1xf32>
    %58 = vector.broadcast %57 : vector<16x1xf32> to vector<16x16xf32>
    %59 = arith.mulf %54, %58 : vector<16x16xf32>
    %60 = arith.truncf %59 : vector<16x16xf32> to vector<16x16xbf16>
    %cst_25 = arith.constant dense<0.000000e+00> : vector<16x8xf32>
    %61 = tpu.matmul %60, %43, %cst_25 {dimension_numbers = #tpu.dot_dimension_numbers<[1], [0], [0], [1], [0, 0, 1, 1], [], []>} : vector<16x16xbf16>, vector<16x8xbf16>, vector<16x8xf32> -> vector<16x8xf32>
    %62 = vector.extract_strided_slice %35 {offsets = [0, 8], sizes = [16, 8], strides = [1, 1]} : vector<16x32xf32> to vector<16x8xf32>
    %63 = arith.truncf %62 : vector<16x8xf32> to vector<16x8xbf16>
    %64 = vector.extract_strided_slice %36 {offsets = [0, 8], sizes = [16, 8], strides = [1, 1]} : vector<16x32xf32> to vector<16x8xf32>
    %65 = arith.truncf %64 : vector<16x8xf32> to vector<16x8xbf16>
    %66 = vector.extract_strided_slice %37 {offsets = [0, 8], sizes = [16, 8], strides = [1, 1]} : vector<16x32xf32> to vector<16x8xf32>
    %67 = arith.truncf %66 : vector<16x8xf32> to vector<16x8xbf16>
    %cst_26 = arith.constant dense<0.000000e+00> : vector<16x16xf32>
    %68 = tpu.matmul %63, %65, %cst_26 {dimension_numbers = #tpu.dot_dimension_numbers<[1], [1], [0], [0], [0, 0, 1, 0], [], []>} : vector<16x8xbf16>, vector<16x8xbf16>, vector<16x16xf32> -> vector<16x16xf32>
    %cst_27 = arith.constant 0.353553385 : f32
    %69 = vector.broadcast %cst_27 : f32 to vector<16x16xf32>
    %70 = arith.mulf %68, %69 : vector<16x16xf32>
    %cst_28 = arith.constant 0.000000e+00 : f32
    %71 = vector.broadcast %cst_28 : f32 to vector<16x16xf32>
    %72 = arith.cmpf oeq, %1, %71 : vector<16x16xf32>
    %73 = arith.select %72, %70, %1 : vector<16x16xi1>, vector<16x16xf32>
    %cst_29 = arith.constant dense<0xFF800000> : vector<16xf32>
    %74 = vector.multi_reduction <maximumf>, %73, %cst_29 [1] : vector<16x16xf32> to vector<16xf32>
    %75 = vector.shape_cast %74 : vector<16xf32> to vector<16x1xf32>
    %76 = vector.broadcast %75 : vector<16x1xf32> to vector<16x16xf32>
    %77 = arith.subf %73, %76 : vector<16x16xf32>
    %78 = math.exp %77 : vector<16x16xf32>
    %cst_30 = arith.constant dense<0.000000e+00> : vector<16xf32>
    %79 = vector.multi_reduction <add>, %78, %cst_30 [1] : vector<16x16xf32> to vector<16xf32>
    %80 = vector.shape_cast %79 : vector<16xf32> to vector<16x1xf32>
    %81 = tpu.reciprocal %80 {approx = true} : vector<16x1xf32> -> vector<16x1xf32>
    %82 = vector.broadcast %81 : vector<16x1xf32> to vector<16x16xf32>
    %83 = arith.mulf %78, %82 : vector<16x16xf32>
    %84 = arith.truncf %83 : vector<16x16xf32> to vector<16x16xbf16>
    %cst_31 = arith.constant dense<0.000000e+00> : vector<16x8xf32>
    %85 = tpu.matmul %84, %67, %cst_31 {dimension_numbers = #tpu.dot_dimension_numbers<[1], [0], [0], [1], [0, 0, 1, 1], [], []>} : vector<16x16xbf16>, vector<16x8xbf16>, vector<16x8xf32> -> vector<16x8xf32>
    %86 = vector.extract_strided_slice %35 {offsets = [0, 16], sizes = [16, 8], strides = [1, 1]} : vector<16x32xf32> to vector<16x8xf32>
    %87 = arith.truncf %86 : vector<16x8xf32> to vector<16x8xbf16>
    %88 = vector.extract_strided_slice %36 {offsets = [0, 16], sizes = [16, 8], strides = [1, 1]} : vector<16x32xf32> to vector<16x8xf32>
    %89 = arith.truncf %88 : vector<16x8xf32> to vector<16x8xbf16>
    %90 = vector.extract_strided_slice %37 {offsets = [0, 16], sizes = [16, 8], strides = [1, 1]} : vector<16x32xf32> to vector<16x8xf32>
    %91 = arith.truncf %90 : vector<16x8xf32> to vector<16x8xbf16>
    %cst_32 = arith.constant dense<0.000000e+00> : vector<16x16xf32>
    %92 = tpu.matmul %87, %89, %cst_32 {dimension_numbers = #tpu.dot_dimension_numbers<[1], [1], [0], [0], [0, 0, 1, 0], [], []>} : vector<16x8xbf16>, vector<16x8xbf16>, vector<16x16xf32> -> vector<16x16xf32>
    %cst_33 = arith.constant 0.353553385 : f32
    %93 = vector.broadcast %cst_33 : f32 to vector<16x16xf32>
    %94 = arith.mulf %92, %93 : vector<16x16xf32>
    %cst_34 = arith.constant 0.000000e+00 : f32
    %95 = vector.broadcast %cst_34 : f32 to vector<16x16xf32>
    %96 = arith.cmpf oeq, %1, %95 : vector<16x16xf32>
    %97 = arith.select %96, %94, %1 : vector<16x16xi1>, vector<16x16xf32>
    %cst_35 = arith.constant dense<0xFF800000> : vector<16xf32>
    %98 = vector.multi_reduction <maximumf>, %97, %cst_35 [1] : vector<16x16xf32> to vector<16xf32>
    %99 = vector.shape_cast %98 : vector<16xf32> to vector<16x1xf32>
    %100 = vector.broadcast %99 : vector<16x1xf32> to vector<16x16xf32>
    %101 = arith.subf %97, %100 : vector<16x16xf32>
    %102 = math.exp %101 : vector<16x16xf32>
    %cst_36 = arith.constant dense<0.000000e+00> : vector<16xf32>
    %103 = vector.multi_reduction <add>, %102, %cst_36 [1] : vector<16x16xf32> to vector<16xf32>
    %104 = vector.shape_cast %103 : vector<16xf32> to vector<16x1xf32>
    %105 = tpu.reciprocal %104 {approx = true} : vector<16x1xf32> -> vector<16x1xf32>
    %106 = vector.broadcast %105 : vector<16x1xf32> to vector<16x16xf32>
    %107 = arith.mulf %102, %106 : vector<16x16xf32>
    %108 = arith.truncf %107 : vector<16x16xf32> to vector<16x16xbf16>
    %cst_37 = arith.constant dense<0.000000e+00> : vector<16x8xf32>
    %109 = tpu.matmul %108, %91, %cst_37 {dimension_numbers = #tpu.dot_dimension_numbers<[1], [0], [0], [1], [0, 0, 1, 1], [], []>} : vector<16x16xbf16>, vector<16x8xbf16>, vector<16x8xf32> -> vector<16x8xf32>
    %110 = vector.extract_strided_slice %35 {offsets = [0, 24], sizes = [16, 8], strides = [1, 1]} : vector<16x32xf32> to vector<16x8xf32>
    %111 = arith.truncf %110 : vector<16x8xf32> to vector<16x8xbf16>
    %112 = vector.extract_strided_slice %36 {offsets = [0, 24], sizes = [16, 8], strides = [1, 1]} : vector<16x32xf32> to vector<16x8xf32>
    %113 = arith.truncf %112 : vector<16x8xf32> to vector<16x8xbf16>
    %114 = vector.extract_strided_slice %37 {offsets = [0, 24], sizes = [16, 8], strides = [1, 1]} : vector<16x32xf32> to vector<16x8xf32>
    %115 = arith.truncf %114 : vector<16x8xf32> to vector<16x8xbf16>
    %cst_38 = arith.constant dense<0.000000e+00> : vector<16x16xf32>
    %116 = tpu.matmul %111, %113, %cst_38 {dimension_numbers = #tpu.dot_dimension_numbers<[1], [1], [0], [0], [0, 0, 1, 0], [], []>} : vector<16x8xbf16>, vector<16x8xbf16>, vector<16x16xf32> -> vector<16x16xf32>
    %cst_39 = arith.constant 0.353553385 : f32
    %117 = vector.broadcast %cst_39 : f32 to vector<16x16xf32>
    %118 = arith.mulf %116, %117 : vector<16x16xf32>
    %cst_40 = arith.constant 0.000000e+00 : f32
    %119 = vector.broadcast %cst_40 : f32 to vector<16x16xf32>
    %120 = arith.cmpf oeq, %1, %119 : vector<16x16xf32>
    %121 = arith.select %120, %118, %1 : vector<16x16xi1>, vector<16x16xf32>
    %cst_41 = arith.constant dense<0xFF800000> : vector<16xf32>
    %122 = vector.multi_reduction <maximumf>, %121, %cst_41 [1] : vector<16x16xf32> to vector<16xf32>
    %123 = vector.shape_cast %122 : vector<16xf32> to vector<16x1xf32>
    %124 = vector.broadcast %123 : vector<16x1xf32> to vector<16x16xf32>
    %125 = arith.subf %121, %124 : vector<16x16xf32>
    %126 = math.exp %125 : vector<16x16xf32>
    %cst_42 = arith.constant dense<0.000000e+00> : vector<16xf32>
    %127 = vector.multi_reduction <add>, %126, %cst_42 [1] : vector<16x16xf32> to vector<16xf32>
    %128 = vector.shape_cast %127 : vector<16xf32> to vector<16x1xf32>
    %129 = tpu.reciprocal %128 {approx = true} : vector<16x1xf32> -> vector<16x1xf32>
    %130 = vector.broadcast %129 : vector<16x1xf32> to vector<16x16xf32>
    %131 = arith.mulf %126, %130 : vector<16x16xf32>
    %132 = arith.truncf %131 : vector<16x16xf32> to vector<16x16xbf16>
    %cst_43 = arith.constant dense<0.000000e+00> : vector<16x8xf32>
    %133 = tpu.matmul %132, %115, %cst_43 {dimension_numbers = #tpu.dot_dimension_numbers<[1], [0], [0], [1], [0, 0, 1, 1], [], []>} : vector<16x16xbf16>, vector<16x8xbf16>, vector<16x8xf32> -> vector<16x8xf32>
    %134 = tpu.concatenate %61, %85, %109, %133 in 1 : vector<16x8xf32>, vector<16x8xf32>, vector<16x8xf32>, vector<16x8xf32> -> vector<16x32xf32>
    %135 = arith.truncf %134 : vector<16x32xf32> to vector<16x32xbf16>
    %c0_44 = arith.constant 0 : index
    %c0_45 = arith.constant 0 : index
    %c0_46 = arith.constant 0 : index
    %136 = vector.load %arg6[%c0_44, %c0_45, %c0_46] : memref<2x32x32xbf16, #tpu.memory_space<vmem>>, vector<1x32x32xbf16>
    %137 = vector.shape_cast %136 : vector<1x32x32xbf16> to vector<32x32xbf16>
    %cst_47 = arith.constant dense<0.000000e+00> : vector<16x32xf32>
    %138 = tpu.matmul %135, %137, %cst_47 {dimension_numbers = #tpu.dot_dimension_numbers<[1], [0], [0], [1], [0, 0, 1, 1], [], []>} : vector<16x32xbf16>, vector<32x32xbf16>, vector<16x32xf32> -> vector<16x32xf32>
    %c0_48 = arith.constant 0 : index
    %c0_49 = arith.constant 0 : index
    %c0_50 = arith.constant 0 : index
    %139 = vector.load %arg7[%c0_48, %c0_49, %c0_50] : memref<2x1x32xf32, #tpu.memory_space<vmem>>, vector<1x1x32xf32>
    %140 = vector.shape_cast %139 : vector<1x1x32xf32> to vector<1x32xf32>
    %141 = vector.broadcast %140 : vector<1x32xf32> to vector<16x32xf32>
    %142 = arith.addf %138, %141 : vector<16x32xf32>
    %143 = arith.addf %0, %142 : vector<16x32xf32>
    %c0_51 = arith.constant 0 : index
    %c0_52 = arith.constant 0 : index
    %c0_53 = arith.constant 0 : index
    %144 = vector.load %arg8[%c0_51, %c0_52, %c0_53] : memref<2x1x32xf32, #tpu.memory_space<vmem>>, vector<1x1x32xf32>
    %145 = vector.shape_cast %144 : vector<1x1x32xf32> to vector<1x32xf32>
    %c0_54 = arith.constant 0 : index
    %c0_55 = arith.constant 0 : index
    %c0_56 = arith.constant 0 : index
    %146 = vector.load %arg9[%c0_54, %c0_55, %c0_56] : memref<2x1x32xf32, #tpu.memory_space<vmem>>, vector<1x1x32xf32>
    %147 = vector.shape_cast %146 : vector<1x1x32xf32> to vector<1x32xf32>
    %cst_57 = arith.constant dense<0.000000e+00> : vector<16xf32>
    %148 = vector.multi_reduction <add>, %143, %cst_57 [1] : vector<16x32xf32> to vector<16xf32>
    %149 = vector.shape_cast %148 : vector<16xf32> to vector<16x1xf32>
    %cst_58 = arith.constant 3.200000e+01 : f32
    %150 = vector.broadcast %cst_58 : f32 to vector<16x1xf32>
    %151 = arith.divf %149, %150 : vector<16x1xf32>
    %152 = vector.broadcast %151 : vector<16x1xf32> to vector<16x32xf32>
    %153 = arith.subf %143, %152 : vector<16x32xf32>
    %154 = arith.mulf %153, %153 : vector<16x32xf32>
    %cst_59 = arith.constant dense<0.000000e+00> : vector<16xf32>
    %155 = vector.multi_reduction <add>, %154, %cst_59 [1] : vector<16x32xf32> to vector<16xf32>
    %156 = vector.shape_cast %155 : vector<16xf32> to vector<16x1xf32>
    %cst_60 = arith.constant 0.0322580636 : f32
    %157 = vector.broadcast %cst_60 : f32 to vector<16x1xf32>
    %158 = arith.mulf %156, %157 : vector<16x1xf32>
    %159 = math.sqrt %158 : vector<16x1xf32>
    %cst_61 = arith.constant 9.99999997E-7 : f32
    %160 = vector.broadcast %cst_61 : f32 to vector<16x1xf32>
    %161 = arith.addf %159, %160 : vector<16x1xf32>
    %162 = tpu.reciprocal %161 {approx = true} : vector<16x1xf32> -> vector<16x1xf32>
    %163 = vector.broadcast %145 : vector<1x32xf32> to vector<16x32xf32>
    %164 = arith.mulf %163, %153 : vector<16x32xf32>
    %165 = vector.broadcast %162 : vector<16x1xf32> to vector<16x32xf32>
    %166 = arith.mulf %164, %165 : vector<16x32xf32>
    %167 = vector.broadcast %147 : vector<1x32xf32> to vector<16x32xf32>
    %168 = arith.addf %166, %167 : vector<16x32xf32>
    %169 = arith.truncf %168 : vector<16x32xf32> to vector<16x32xbf16>
    %c0_62 = arith.constant 0 : index
    %c0_63 = arith.constant 0 : index
    %c0_64 = arith.constant 0 : index
    %170 = vector.load %arg10[%c0_62, %c0_63, %c0_64] : memref<2x32x128xbf16, #tpu.memory_space<vmem>>, vector<1x32x128xbf16>
    %171 = vector.shape_cast %170 : vector<1x32x128xbf16> to vector<32x128xbf16>
    %cst_65 = arith.constant dense<0.000000e+00> : vector<16x128xf32>
    %172 = tpu.matmul %169, %171, %cst_65 {dimension_numbers = #tpu.dot_dimension_numbers<[1], [0], [0], [1], [0, 0, 1, 1], [], []>} : vector<16x32xbf16>, vector<32x128xbf16>, vector<16x128xf32> -> vector<16x128xf32>
    %c0_66 = arith.constant 0 : index
    %c0_67 = arith.constant 0 : index
    %c0_68 = arith.constant 0 : index
    %173 = vector.load %arg11[%c0_66, %c0_67, %c0_68] : memref<2x1x128xf32, #tpu.memory_space<vmem>>, vector<1x1x128xf32>
    %174 = vector.shape_cast %173 : vector<1x1x128xf32> to vector<1x128xf32>
    %175 = vector.broadcast %174 : vector<1x128xf32> to vector<16x128xf32>
    %176 = arith.addf %172, %175 : vector<16x128xf32>
    %cst_69 = arith.constant 5.000000e-01 : f32
    %177 = vector.broadcast %cst_69 : f32 to vector<16x128xf32>
    %178 = arith.mulf %177, %176 : vector<16x128xf32>
    %cst_70 = arith.constant 4.471500e-02 : f32
    %179 = vector.broadcast %cst_70 : f32 to vector<16x128xf32>
    %180 = arith.mulf %179, %176 : vector<16x128xf32>
    %181 = arith.mulf %180, %176 : vector<16x128xf32>
    %182 = arith.mulf %181, %176 : vector<16x128xf32>
    %183 = arith.addf %176, %182 : vector<16x128xf32>
    %cst_71 = arith.constant 0.797884583 : f32
    %184 = vector.broadcast %cst_71 : f32 to vector<16x128xf32>
    %185 = arith.mulf %184, %183 : vector<16x128xf32>
    %186 = math.tanh %185 : vector<16x128xf32>
    %cst_72 = arith.constant 1.000000e+00 : f32
    %187 = vector.broadcast %cst_72 : f32 to vector<16x128xf32>
    %188 = arith.addf %187, %186 : vector<16x128xf32>
    %189 = arith.mulf %178, %188 : vector<16x128xf32>
    %190 = arith.truncf %189 : vector<16x128xf32> to vector<16x128xbf16>
    %c0_73 = arith.constant 0 : index
    %c0_74 = arith.constant 0 : index
    %c0_75 = arith.constant 0 : index
    %191 = vector.load %arg12[%c0_73, %c0_74, %c0_75] : memref<2x128x32xbf16, #tpu.memory_space<vmem>>, vector<1x128x32xbf16>
    %192 = vector.shape_cast %191 : vector<1x128x32xbf16> to vector<128x32xbf16>
    %cst_76 = arith.constant dense<0.000000e+00> : vector<16x32xf32>
    %193 = tpu.matmul %190, %192, %cst_76 {dimension_numbers = #tpu.dot_dimension_numbers<[1], [0], [0], [1], [0, 0, 1, 1], [], []>} : vector<16x128xbf16>, vector<128x32xbf16>, vector<16x32xf32> -> vector<16x32xf32>
    %c0_77 = arith.constant 0 : index
    %c0_78 = arith.constant 0 : index
    %c0_79 = arith.constant 0 : index
    %194 = vector.load %arg13[%c0_77, %c0_78, %c0_79] : memref<2x1x32xf32, #tpu.memory_space<vmem>>, vector<1x1x32xf32>
    %195 = vector.shape_cast %194 : vector<1x1x32xf32> to vector<1x32xf32>
    %196 = vector.broadcast %195 : vector<1x32xf32> to vector<16x32xf32>
    %197 = arith.addf %193, %196 : vector<16x32xf32>
    %198 = arith.addf %143, %197 : vector<16x32xf32>
    %c1 = arith.constant 1 : index
    %c0_80 = arith.constant 0 : index
    %c0_81 = arith.constant 0 : index
    %199 = vector.load %arg2[%c1, %c0_80, %c0_81] : memref<2x1x32xf32, #tpu.memory_space<vmem>>, vector<1x1x32xf32>
    %200 = vector.shape_cast %199 : vector<1x1x32xf32> to vector<1x32xf32>
    %c1_82 = arith.constant 1 : index
    %c0_83 = arith.constant 0 : index
    %c0_84 = arith.constant 0 : index
    %201 = vector.load %arg3[%c1_82, %c0_83, %c0_84] : memref<2x1x32xf32, #tpu.memory_space<vmem>>, vector<1x1x32xf32>
    %202 = vector.shape_cast %201 : vector<1x1x32xf32> to vector<1x32xf32>
    %cst_85 = arith.constant dense<0.000000e+00> : vector<16xf32>
    %203 = vector.multi_reduction <add>, %198, %cst_85 [1] : vector<16x32xf32> to vector<16xf32>
    %204 = vector.shape_cast %203 : vector<16xf32> to vector<16x1xf32>
    %cst_86 = arith.constant 3.200000e+01 : f32
    %205 = vector.broadcast %cst_86 : f32 to vector<16x1xf32>
    %206 = arith.divf %204, %205 : vector<16x1xf32>
    %207 = vector.broadcast %206 : vector<16x1xf32> to vector<16x32xf32>
    %208 = arith.subf %198, %207 : vector<16x32xf32>
    %209 = arith.mulf %208, %208 : vector<16x32xf32>
    %cst_87 = arith.constant dense<0.000000e+00> : vector<16xf32>
    %210 = vector.multi_reduction <add>, %209, %cst_87 [1] : vector<16x32xf32> to vector<16xf32>
    %211 = vector.shape_cast %210 : vector<16xf32> to vector<16x1xf32>
    %cst_88 = arith.constant 0.0322580636 : f32
    %212 = vector.broadcast %cst_88 : f32 to vector<16x1xf32>
    %213 = arith.mulf %211, %212 : vector<16x1xf32>
    %214 = math.sqrt %213 : vector<16x1xf32>
    %cst_89 = arith.constant 9.99999997E-7 : f32
    %215 = vector.broadcast %cst_89 : f32 to vector<16x1xf32>
    %216 = arith.addf %214, %215 : vector<16x1xf32>
    %217 = tpu.reciprocal %216 {approx = true} : vector<16x1xf32> -> vector<16x1xf32>
    %218 = vector.broadcast %200 : vector<1x32xf32> to vector<16x32xf32>
    %219 = arith.mulf %218, %208 : vector<16x32xf32>
    %220 = vector.broadcast %217 : vector<16x1xf32> to vector<16x32xf32>
    %221 = arith.mulf %219, %220 : vector<16x32xf32>
    %222 = vector.broadcast %202 : vector<1x32xf32> to vector<16x32xf32>
    %223 = arith.addf %221, %222 : vector<16x32xf32>
    %224 = arith.truncf %223 : vector<16x32xf32> to vector<16x32xbf16>
    %c1_90 = arith.constant 1 : index
    %c0_91 = arith.constant 0 : index
    %c0_92 = arith.constant 0 : index
    %225 = vector.load %arg4[%c1_90, %c0_91, %c0_92] : memref<2x32x96xbf16, #tpu.memory_space<vmem>>, vector<1x32x96xbf16>
    %226 = vector.shape_cast %225 : vector<1x32x96xbf16> to vector<32x96xbf16>
    %cst_93 = arith.constant dense<0.000000e+00> : vector<16x96xf32>
    %227 = tpu.matmul %224, %226, %cst_93 {dimension_numbers = #tpu.dot_dimension_numbers<[1], [0], [0], [1], [0, 0, 1, 1], [], []>} : vector<16x32xbf16>, vector<32x96xbf16>, vector<16x96xf32> -> vector<16x96xf32>
    %c1_94 = arith.constant 1 : index
    %c0_95 = arith.constant 0 : index
    %c0_96 = arith.constant 0 : index
    %228 = vector.load %arg5[%c1_94, %c0_95, %c0_96] : memref<2x1x96xf32, #tpu.memory_space<vmem>>, vector<1x1x96xf32>
    %229 = vector.shape_cast %228 : vector<1x1x96xf32> to vector<1x96xf32>
    %230 = vector.broadcast %229 : vector<1x96xf32> to vector<16x96xf32>
    %231 = arith.addf %227, %230 : vector<16x96xf32>
    %232 = vector.extract_strided_slice %231 {offsets = [0, 0], sizes = [16, 32], strides = [1, 1]} : vector<16x96xf32> to vector<16x32xf32>
    %233 = vector.extract_strided_slice %231 {offsets = [0, 32], sizes = [16, 32], strides = [1, 1]} : vector<16x96xf32> to vector<16x32xf32>
    %234 = vector.extract_strided_slice %231 {offsets = [0, 64], sizes = [16, 32], strides = [1, 1]} : vector<16x96xf32> to vector<16x32xf32>
    %235 = vector.extract_strided_slice %232 {offsets = [0, 0], sizes = [16, 8], strides = [1, 1]} : vector<16x32xf32> to vector<16x8xf32>
    %236 = arith.truncf %235 : vector<16x8xf32> to vector<16x8xbf16>
    %237 = vector.extract_strided_slice %233 {offsets = [0, 0], sizes = [16, 8], strides = [1, 1]} : vector<16x32xf32> to vector<16x8xf32>
    %238 = arith.truncf %237 : vector<16x8xf32> to vector<16x8xbf16>
    %239 = vector.extract_strided_slice %234 {offsets = [0, 0], sizes = [16, 8], strides = [1, 1]} : vector<16x32xf32> to vector<16x8xf32>
    %240 = arith.truncf %239 : vector<16x8xf32> to vector<16x8xbf16>
    %cst_97 = arith.constant dense<0.000000e+00> : vector<16x16xf32>
    %241 = tpu.matmul %236, %238, %cst_97 {dimension_numbers = #tpu.dot_dimension_numbers<[1], [1], [0], [0], [0, 0, 1, 0], [], []>} : vector<16x8xbf16>, vector<16x8xbf16>, vector<16x16xf32> -> vector<16x16xf32>
    %cst_98 = arith.constant 0.353553385 : f32
    %242 = vector.broadcast %cst_98 : f32 to vector<16x16xf32>
    %243 = arith.mulf %241, %242 : vector<16x16xf32>
    %cst_99 = arith.constant 0.000000e+00 : f32
    %244 = vector.broadcast %cst_99 : f32 to vector<16x16xf32>
    %245 = arith.cmpf oeq, %1, %244 : vector<16x16xf32>
    %246 = arith.select %245, %243, %1 : vector<16x16xi1>, vector<16x16xf32>
    %cst_100 = arith.constant dense<0xFF800000> : vector<16xf32>
    %247 = vector.multi_reduction <maximumf>, %246, %cst_100 [1] : vector<16x16xf32> to vector<16xf32>
    %248 = vector.shape_cast %247 : vector<16xf32> to vector<16x1xf32>
    %249 = vector.broadcast %248 : vector<16x1xf32> to vector<16x16xf32>
    %250 = arith.subf %246, %249 : vector<16x16xf32>
    %251 = math.exp %250 : vector<16x16xf32>
    %cst_101 = arith.constant dense<0.000000e+00> : vector<16xf32>
    %252 = vector.multi_reduction <add>, %251, %cst_101 [1] : vector<16x16xf32> to vector<16xf32>
    %253 = vector.shape_cast %252 : vector<16xf32> to vector<16x1xf32>
    %254 = tpu.reciprocal %253 {approx = true} : vector<16x1xf32> -> vector<16x1xf32>
    %255 = vector.broadcast %254 : vector<16x1xf32> to vector<16x16xf32>
    %256 = arith.mulf %251, %255 : vector<16x16xf32>
    %257 = arith.truncf %256 : vector<16x16xf32> to vector<16x16xbf16>
    %cst_102 = arith.constant dense<0.000000e+00> : vector<16x8xf32>
    %258 = tpu.matmul %257, %240, %cst_102 {dimension_numbers = #tpu.dot_dimension_numbers<[1], [0], [0], [1], [0, 0, 1, 1], [], []>} : vector<16x16xbf16>, vector<16x8xbf16>, vector<16x8xf32> -> vector<16x8xf32>
    %259 = vector.extract_strided_slice %232 {offsets = [0, 8], sizes = [16, 8], strides = [1, 1]} : vector<16x32xf32> to vector<16x8xf32>
    %260 = arith.truncf %259 : vector<16x8xf32> to vector<16x8xbf16>
    %261 = vector.extract_strided_slice %233 {offsets = [0, 8], sizes = [16, 8], strides = [1, 1]} : vector<16x32xf32> to vector<16x8xf32>
    %262 = arith.truncf %261 : vector<16x8xf32> to vector<16x8xbf16>
    %263 = vector.extract_strided_slice %234 {offsets = [0, 8], sizes = [16, 8], strides = [1, 1]} : vector<16x32xf32> to vector<16x8xf32>
    %264 = arith.truncf %263 : vector<16x8xf32> to vector<16x8xbf16>
    %cst_103 = arith.constant dense<0.000000e+00> : vector<16x16xf32>
    %265 = tpu.matmul %260, %262, %cst_103 {dimension_numbers = #tpu.dot_dimension_numbers<[1], [1], [0], [0], [0, 0, 1, 0], [], []>} : vector<16x8xbf16>, vector<16x8xbf16>, vector<16x16xf32> -> vector<16x16xf32>
    %cst_104 = arith.constant 0.353553385 : f32
    %266 = vector.broadcast %cst_104 : f32 to vector<16x16xf32>
    %267 = arith.mulf %265, %266 : vector<16x16xf32>
    %cst_105 = arith.constant 0.000000e+00 : f32
    %268 = vector.broadcast %cst_105 : f32 to vector<16x16xf32>
    %269 = arith.cmpf oeq, %1, %268 : vector<16x16xf32>
    %270 = arith.select %269, %267, %1 : vector<16x16xi1>, vector<16x16xf32>
    %cst_106 = arith.constant dense<0xFF800000> : vector<16xf32>
    %271 = vector.multi_reduction <maximumf>, %270, %cst_106 [1] : vector<16x16xf32> to vector<16xf32>
    %272 = vector.shape_cast %271 : vector<16xf32> to vector<16x1xf32>
    %273 = vector.broadcast %272 : vector<16x1xf32> to vector<16x16xf32>
    %274 = arith.subf %270, %273 : vector<16x16xf32>
    %275 = math.exp %274 : vector<16x16xf32>
    %cst_107 = arith.constant dense<0.000000e+00> : vector<16xf32>
    %276 = vector.multi_reduction <add>, %275, %cst_107 [1] : vector<16x16xf32> to vector<16xf32>
    %277 = vector.shape_cast %276 : vector<16xf32> to vector<16x1xf32>
    %278 = tpu.reciprocal %277 {approx = true} : vector<16x1xf32> -> vector<16x1xf32>
    %279 = vector.broadcast %278 : vector<16x1xf32> to vector<16x16xf32>
    %280 = arith.mulf %275, %279 : vector<16x16xf32>
    %281 = arith.truncf %280 : vector<16x16xf32> to vector<16x16xbf16>
    %cst_108 = arith.constant dense<0.000000e+00> : vector<16x8xf32>
    %282 = tpu.matmul %281, %264, %cst_108 {dimension_numbers = #tpu.dot_dimension_numbers<[1], [0], [0], [1], [0, 0, 1, 1], [], []>} : vector<16x16xbf16>, vector<16x8xbf16>, vector<16x8xf32> -> vector<16x8xf32>
    %283 = vector.extract_strided_slice %232 {offsets = [0, 16], sizes = [16, 8], strides = [1, 1]} : vector<16x32xf32> to vector<16x8xf32>
    %284 = arith.truncf %283 : vector<16x8xf32> to vector<16x8xbf16>
    %285 = vector.extract_strided_slice %233 {offsets = [0, 16], sizes = [16, 8], strides = [1, 1]} : vector<16x32xf32> to vector<16x8xf32>
    %286 = arith.truncf %285 : vector<16x8xf32> to vector<16x8xbf16>
    %287 = vector.extract_strided_slice %234 {offsets = [0, 16], sizes = [16, 8], strides = [1, 1]} : vector<16x32xf32> to vector<16x8xf32>
    %288 = arith.truncf %287 : vector<16x8xf32> to vector<16x8xbf16>
    %cst_109 = arith.constant dense<0.000000e+00> : vector<16x16xf32>
    %289 = tpu.matmul %284, %286, %cst_109 {dimension_numbers = #tpu.dot_dimension_numbers<[1], [1], [0], [0], [0, 0, 1, 0], [], []>} : vector<16x8xbf16>, vector<16x8xbf16>, vector<16x16xf32> -> vector<16x16xf32>
    %cst_110 = arith.constant 0.353553385 : f32
    %290 = vector.broadcast %cst_110 : f32 to vector<16x16xf32>
    %291 = arith.mulf %289, %290 : vector<16x16xf32>
    %cst_111 = arith.constant 0.000000e+00 : f32
    %292 = vector.broadcast %cst_111 : f32 to vector<16x16xf32>
    %293 = arith.cmpf oeq, %1, %292 : vector<16x16xf32>
    %294 = arith.select %293, %291, %1 : vector<16x16xi1>, vector<16x16xf32>
    %cst_112 = arith.constant dense<0xFF800000> : vector<16xf32>
    %295 = vector.multi_reduction <maximumf>, %294, %cst_112 [1] : vector<16x16xf32> to vector<16xf32>
    %296 = vector.shape_cast %295 : vector<16xf32> to vector<16x1xf32>
    %297 = vector.broadcast %296 : vector<16x1xf32> to vector<16x16xf32>
    %298 = arith.subf %294, %297 : vector<16x16xf32>
    %299 = math.exp %298 : vector<16x16xf32>
    %cst_113 = arith.constant dense<0.000000e+00> : vector<16xf32>
    %300 = vector.multi_reduction <add>, %299, %cst_113 [1] : vector<16x16xf32> to vector<16xf32>
    %301 = vector.shape_cast %300 : vector<16xf32> to vector<16x1xf32>
    %302 = tpu.reciprocal %301 {approx = true} : vector<16x1xf32> -> vector<16x1xf32>
    %303 = vector.broadcast %302 : vector<16x1xf32> to vector<16x16xf32>
    %304 = arith.mulf %299, %303 : vector<16x16xf32>
    %305 = arith.truncf %304 : vector<16x16xf32> to vector<16x16xbf16>
    %cst_114 = arith.constant dense<0.000000e+00> : vector<16x8xf32>
    %306 = tpu.matmul %305, %288, %cst_114 {dimension_numbers = #tpu.dot_dimension_numbers<[1], [0], [0], [1], [0, 0, 1, 1], [], []>} : vector<16x16xbf16>, vector<16x8xbf16>, vector<16x8xf32> -> vector<16x8xf32>
    %307 = vector.extract_strided_slice %232 {offsets = [0, 24], sizes = [16, 8], strides = [1, 1]} : vector<16x32xf32> to vector<16x8xf32>
    %308 = arith.truncf %307 : vector<16x8xf32> to vector<16x8xbf16>
    %309 = vector.extract_strided_slice %233 {offsets = [0, 24], sizes = [16, 8], strides = [1, 1]} : vector<16x32xf32> to vector<16x8xf32>
    %310 = arith.truncf %309 : vector<16x8xf32> to vector<16x8xbf16>
    %311 = vector.extract_strided_slice %234 {offsets = [0, 24], sizes = [16, 8], strides = [1, 1]} : vector<16x32xf32> to vector<16x8xf32>
    %312 = arith.truncf %311 : vector<16x8xf32> to vector<16x8xbf16>
    %cst_115 = arith.constant dense<0.000000e+00> : vector<16x16xf32>
    %313 = tpu.matmul %308, %310, %cst_115 {dimension_numbers = #tpu.dot_dimension_numbers<[1], [1], [0], [0], [0, 0, 1, 0], [], []>} : vector<16x8xbf16>, vector<16x8xbf16>, vector<16x16xf32> -> vector<16x16xf32>
    %cst_116 = arith.constant 0.353553385 : f32
    %314 = vector.broadcast %cst_116 : f32 to vector<16x16xf32>
    %315 = arith.mulf %313, %314 : vector<16x16xf32>
    %cst_117 = arith.constant 0.000000e+00 : f32
    %316 = vector.broadcast %cst_117 : f32 to vector<16x16xf32>
    %317 = arith.cmpf oeq, %1, %316 : vector<16x16xf32>
    %318 = arith.select %317, %315, %1 : vector<16x16xi1>, vector<16x16xf32>
    %cst_118 = arith.constant dense<0xFF800000> : vector<16xf32>
    %319 = vector.multi_reduction <maximumf>, %318, %cst_118 [1] : vector<16x16xf32> to vector<16xf32>
    %320 = vector.shape_cast %319 : vector<16xf32> to vector<16x1xf32>
    %321 = vector.broadcast %320 : vector<16x1xf32> to vector<16x16xf32>
    %322 = arith.subf %318, %321 : vector<16x16xf32>
    %323 = math.exp %322 : vector<16x16xf32>
    %cst_119 = arith.constant dense<0.000000e+00> : vector<16xf32>
    %324 = vector.multi_reduction <add>, %323, %cst_119 [1] : vector<16x16xf32> to vector<16xf32>
    %325 = vector.shape_cast %324 : vector<16xf32> to vector<16x1xf32>
    %326 = tpu.reciprocal %325 {approx = true} : vector<16x1xf32> -> vector<16x1xf32>
    %327 = vector.broadcast %326 : vector<16x1xf32> to vector<16x16xf32>
    %328 = arith.mulf %323, %327 : vector<16x16xf32>
    %329 = arith.truncf %328 : vector<16x16xf32> to vector<16x16xbf16>
    %cst_120 = arith.constant dense<0.000000e+00> : vector<16x8xf32>
    %330 = tpu.matmul %329, %312, %cst_120 {dimension_numbers = #tpu.dot_dimension_numbers<[1], [0], [0], [1], [0, 0, 1, 1], [], []>} : vector<16x16xbf16>, vector<16x8xbf16>, vector<16x8xf32> -> vector<16x8xf32>
    %331 = tpu.concatenate %258, %282, %306, %330 in 1 : vector<16x8xf32>, vector<16x8xf32>, vector<16x8xf32>, vector<16x8xf32> -> vector<16x32xf32>
    %332 = arith.truncf %331 : vector<16x32xf32> to vector<16x32xbf16>
    %c1_121 = arith.constant 1 : index
    %c0_122 = arith.constant 0 : index
    %c0_123 = arith.constant 0 : index
    %333 = vector.load %arg6[%c1_121, %c0_122, %c0_123] : memref<2x32x32xbf16, #tpu.memory_space<vmem>>, vector<1x32x32xbf16>
    %334 = vector.shape_cast %333 : vector<1x32x32xbf16> to vector<32x32xbf16>
    %cst_124 = arith.constant dense<0.000000e+00> : vector<16x32xf32>
    %335 = tpu.matmul %332, %334, %cst_124 {dimension_numbers = #tpu.dot_dimension_numbers<[1], [0], [0], [1], [0, 0, 1, 1], [], []>} : vector<16x32xbf16>, vector<32x32xbf16>, vector<16x32xf32> -> vector<16x32xf32>
    %c1_125 = arith.constant 1 : index
    %c0_126 = arith.constant 0 : index
    %c0_127 = arith.constant 0 : index
    %336 = vector.load %arg7[%c1_125, %c0_126, %c0_127] : memref<2x1x32xf32, #tpu.memory_space<vmem>>, vector<1x1x32xf32>
    %337 = vector.shape_cast %336 : vector<1x1x32xf32> to vector<1x32xf32>
    %338 = vector.broadcast %337 : vector<1x32xf32> to vector<16x32xf32>
    %339 = arith.addf %335, %338 : vector<16x32xf32>
    %340 = arith.addf %198, %339 : vector<16x32xf32>
    %c1_128 = arith.constant 1 : index
    %c0_129 = arith.constant 0 : index
    %c0_130 = arith.constant 0 : index
    %341 = vector.load %arg8[%c1_128, %c0_129, %c0_130] : memref<2x1x32xf32, #tpu.memory_space<vmem>>, vector<1x1x32xf32>
    %342 = vector.shape_cast %341 : vector<1x1x32xf32> to vector<1x32xf32>
    %c1_131 = arith.constant 1 : index
    %c0_132 = arith.constant 0 : index
    %c0_133 = arith.constant 0 : index
    %343 = vector.load %arg9[%c1_131, %c0_132, %c0_133] : memref<2x1x32xf32, #tpu.memory_space<vmem>>, vector<1x1x32xf32>
    %344 = vector.shape_cast %343 : vector<1x1x32xf32> to vector<1x32xf32>
    %cst_134 = arith.constant dense<0.000000e+00> : vector<16xf32>
    %345 = vector.multi_reduction <add>, %340, %cst_134 [1] : vector<16x32xf32> to vector<16xf32>
    %346 = vector.shape_cast %345 : vector<16xf32> to vector<16x1xf32>
    %cst_135 = arith.constant 3.200000e+01 : f32
    %347 = vector.broadcast %cst_135 : f32 to vector<16x1xf32>
    %348 = arith.divf %346, %347 : vector<16x1xf32>
    %349 = vector.broadcast %348 : vector<16x1xf32> to vector<16x32xf32>
    %350 = arith.subf %340, %349 : vector<16x32xf32>
    %351 = arith.mulf %350, %350 : vector<16x32xf32>
    %cst_136 = arith.constant dense<0.000000e+00> : vector<16xf32>
    %352 = vector.multi_reduction <add>, %351, %cst_136 [1] : vector<16x32xf32> to vector<16xf32>
    %353 = vector.shape_cast %352 : vector<16xf32> to vector<16x1xf32>
    %cst_137 = arith.constant 0.0322580636 : f32
    %354 = vector.broadcast %cst_137 : f32 to vector<16x1xf32>
    %355 = arith.mulf %353, %354 : vector<16x1xf32>
    %356 = math.sqrt %355 : vector<16x1xf32>
    %cst_138 = arith.constant 9.99999997E-7 : f32
    %357 = vector.broadcast %cst_138 : f32 to vector<16x1xf32>
    %358 = arith.addf %356, %357 : vector<16x1xf32>
    %359 = tpu.reciprocal %358 {approx = true} : vector<16x1xf32> -> vector<16x1xf32>
    %360 = vector.broadcast %342 : vector<1x32xf32> to vector<16x32xf32>
    %361 = arith.mulf %360, %350 : vector<16x32xf32>
    %362 = vector.broadcast %359 : vector<16x1xf32> to vector<16x32xf32>
    %363 = arith.mulf %361, %362 : vector<16x32xf32>
    %364 = vector.broadcast %344 : vector<1x32xf32> to vector<16x32xf32>
    %365 = arith.addf %363, %364 : vector<16x32xf32>
    %366 = arith.truncf %365 : vector<16x32xf32> to vector<16x32xbf16>
    %c1_139 = arith.constant 1 : index
    %c0_140 = arith.constant 0 : index
    %c0_141 = arith.constant 0 : index
    %367 = vector.load %arg10[%c1_139, %c0_140, %c0_141] : memref<2x32x128xbf16, #tpu.memory_space<vmem>>, vector<1x32x128xbf16>
    %368 = vector.shape_cast %367 : vector<1x32x128xbf16> to vector<32x128xbf16>
    %cst_142 = arith.constant dense<0.000000e+00> : vector<16x128xf32>
    %369 = tpu.matmul %366, %368, %cst_142 {dimension_numbers = #tpu.dot_dimension_numbers<[1], [0], [0], [1], [0, 0, 1, 1], [], []>} : vector<16x32xbf16>, vector<32x128xbf16>, vector<16x128xf32> -> vector<16x128xf32>
    %c1_143 = arith.constant 1 : index
    %c0_144 = arith.constant 0 : index
    %c0_145 = arith.constant 0 : index
    %370 = vector.load %arg11[%c1_143, %c0_144, %c0_145] : memref<2x1x128xf32, #tpu.memory_space<vmem>>, vector<1x1x128xf32>
    %371 = vector.shape_cast %370 : vector<1x1x128xf32> to vector<1x128xf32>
    %372 = vector.broadcast %371 : vector<1x128xf32> to vector<16x128xf32>
    %373 = arith.addf %369, %372 : vector<16x128xf32>
    %cst_146 = arith.constant 5.000000e-01 : f32
    %374 = vector.broadcast %cst_146 : f32 to vector<16x128xf32>
    %375 = arith.mulf %374, %373 : vector<16x128xf32>
    %cst_147 = arith.constant 4.471500e-02 : f32
    %376 = vector.broadcast %cst_147 : f32 to vector<16x128xf32>
    %377 = arith.mulf %376, %373 : vector<16x128xf32>
    %378 = arith.mulf %377, %373 : vector<16x128xf32>
    %379 = arith.mulf %378, %373 : vector<16x128xf32>
    %380 = arith.addf %373, %379 : vector<16x128xf32>
    %cst_148 = arith.constant 0.797884583 : f32
    %381 = vector.broadcast %cst_148 : f32 to vector<16x128xf32>
    %382 = arith.mulf %381, %380 : vector<16x128xf32>
    %383 = math.tanh %382 : vector<16x128xf32>
    %cst_149 = arith.constant 1.000000e+00 : f32
    %384 = vector.broadcast %cst_149 : f32 to vector<16x128xf32>
    %385 = arith.addf %384, %383 : vector<16x128xf32>
    %386 = arith.mulf %375, %385 : vector<16x128xf32>
    %387 = arith.truncf %386 : vector<16x128xf32> to vector<16x128xbf16>
    %c1_150 = arith.constant 1 : index
    %c0_151 = arith.constant 0 : index
    %c0_152 = arith.constant 0 : index
    %388 = vector.load %arg12[%c1_150, %c0_151, %c0_152] : memref<2x128x32xbf16, #tpu.memory_space<vmem>>, vector<1x128x32xbf16>
    %389 = vector.shape_cast %388 : vector<1x128x32xbf16> to vector<128x32xbf16>
    %cst_153 = arith.constant dense<0.000000e+00> : vector<16x32xf32>
    %390 = tpu.matmul %387, %389, %cst_153 {dimension_numbers = #tpu.dot_dimension_numbers<[1], [0], [0], [1], [0, 0, 1, 1], [], []>} : vector<16x128xbf16>, vector<128x32xbf16>, vector<16x32xf32> -> vector<16x32xf32>
    %c1_154 = arith.constant 1 : index
    %c0_155 = arith.constant 0 : index
    %c0_156 = arith.constant 0 : index
    %391 = vector.load %arg13[%c1_154, %c0_155, %c0_156] : memref<2x1x32xf32, #tpu.memory_space<vmem>>, vector<1x1x32xf32>
    %392 = vector.shape_cast %391 : vector<1x1x32xf32> to vector<1x32xf32>
    %393 = vector.broadcast %392 : vector<1x32xf32> to vector<16x32xf32>
    %394 = arith.addf %390, %393 : vector<16x32xf32>
    %395 = arith.addf %340, %394 : vector<16x32xf32>
    %c0_157 = arith.constant 0 : index
    %c0_158 = arith.constant 0 : index
    %396 = vector.load %arg14[%c0_157, %c0_158] : memref<16x32xf32, #tpu.memory_space<vmem>>, vector<16x32xf32>
    tpu.vector_store %arg14[%c0_157, %c0_158], %395 {strides = array<i32>} : memref<16x32xf32, #tpu.memory_space<vmem>>, vector<16x32xf32>,
    return
  }
}

</mosaic_0001>

<llo_original>
// kernel: context_encoder_forward.1
$region0: #{context_encoder_forward.1}
  #allocation0 [shape = 'u32[]', space=smem, size = 0x4, offset = 0x4, fixed_abs, tag = 'smem constant byte address 0x4 - core index']
  #allocation1 [shape = 'u32[144,128]{1,0:T(1,128)}', space=vmem, size = 0x12000, scoped, tag = 'internal scratch']
  %s0 = inlined_call_operand.vmem [shape: f32[16,32], index: 0, kind: input, shape index: {}]
  %s1 = inlined_call_operand.vmem [shape: f32[16,16], index: 1, kind: input, shape index: {}]
  %s2 = inlined_call_operand.vmem [shape: f32[2,1,32], index: 2, kind: input, shape index: {}]
  %s3 = inlined_call_operand.vmem [shape: f32[2,1,32], index: 3, kind: input, shape index: {}]
  %s4 = inlined_call_operand.vmem [shape: bf16[2,32,96], index: 4, kind: input, shape index: {}]
  %s5 = inlined_call_operand.vmem [shape: f32[2,1,96], index: 5, kind: input, shape index: {}]
  %s6 = inlined_call_operand.vmem [shape: bf16[2,32,32], index: 6, kind: input, shape index: {}]
  %s7 = inlined_call_operand.vmem [shape: f32[2,1,32], index: 7, kind: input, shape index: {}]
  %s8 = inlined_call_operand.vmem [shape: f32[2,1,32], index: 8, kind: input, shape index: {}]
  %s9 = inlined_call_operand.vmem [shape: f32[2,1,32], index: 9, kind: input, shape index: {}]
  %s10 = inlined_call_operand.vmem [shape: bf16[2,32,128], index: 10, kind: input, shape index: {}]
  %s11 = inlined_call_operand.vmem [shape: f32[2,1,128], index: 11, kind: input, shape index: {}]
  %s12 = inlined_call_operand.vmem [shape: bf16[2,128,32], index: 12, kind: input, shape index: {}]
  %s13 = inlined_call_operand.vmem [shape: f32[2,1,32], index: 13, kind: input, shape index: {}]
  %s14 = inlined_call_operand.hbm [shape: f32[16,32], index: 14, kind: output, shape index: {}]
  %s15 = sld [smem:[#allocation0]]
  $region66: #{context_encoder_forward.1} parent=0
    _
  %s17 = ssub.s32 1, %s15
  %s18 = scalar_select 0, %s17, %s15
  $region1: #{context_encoder_forward.1} parent=0
    #allocation2 [shape = 'u8[8192]{0}', space=vmem, size = 0x2000, scoped, tag = 'output window, operand 0, single buffered']
    #allocation3 [shape = 's32[1]{0}', space=sflag, size = 0x4, scoped, tag = 'scoped memory for context_encoder_forward.1']
    %19 = vsyncpa [#allocation3], 0
    // Predicated region
    $region2: #{context_encoder_forward.1} parent=1 // pred_check
      _
    $region3: #{context_encoder_forward.1} parent=1 // pred_check_branch
      %21 = sbr.rel (0) target = $region5
    $region4: #{context_encoder_forward.1} parent=1 // pred_region
      _
    $region5: #{context_encoder_forward.1} parent=1 // pred_fallthru
      _
    // Predicated region
    $region6: #{context_encoder_forward.1} parent=1 // pred_check
      _
    $region7: #{context_encoder_forward.1} parent=1 // pred_check_branch
      %23 = sbr.rel (0) target = $region9
    $region8: #{context_encoder_forward.1} parent=1 // pred_region
      _
    $region9: #{context_encoder_forward.1} parent=1 // pred_fallthru
      _
    // Predicated region
    $region10: #{context_encoder_forward.1} parent=1 // pred_check
      _
    $region11: #{context_encoder_forward.1} parent=1 // pred_check_branch
      %25 = sbr.rel (0) target = $region13
    $region12: #{context_encoder_forward.1} parent=1 // pred_region
      _
    $region13: #{context_encoder_forward.1} parent=1 // pred_fallthru
      _
    // Predicated region
    $region14: #{context_encoder_forward.1} parent=1 // pred_check
      _
    $region15: #{context_encoder_forward.1} parent=1 // pred_check_branch
      %27 = sbr.rel (0) target = $region17
    $region16: #{context_encoder_forward.1} parent=1 // pred_region
      _
    $region17: #{context_encoder_forward.1} parent=1 // pred_fallthru
      _
    // Predicated region
    $region18: #{context_encoder_forward.1} parent=1 // pred_check
      _
    $region19: #{context_encoder_forward.1} parent=1 // pred_check_branch
      %29 = sbr.rel (0) target = $region21
    $region20: #{context_encoder_forward.1} parent=1 // pred_region
      _
    $region21: #{context_encoder_forward.1} parent=1 // pred_fallthru
      _
    // Predicated region
    $region22: #{context_encoder_forward.1} parent=1 // pred_check
      _
    $region23: #{context_encoder_forward.1} parent=1 // pred_check_branch
      %31 = sbr.rel (0) target = $region25
    $region24: #{context_encoder_forward.1} parent=1 // pred_region
      _
    $region25: #{context_encoder_forward.1} parent=1 // pred_fallthru
      _
    // Predicated region
    $region26: #{context_encoder_forward.1} parent=1 // pred_check
      _
    $region27: #{context_encoder_forward.1} parent=1 // pred_check_branch
      %33 = sbr.rel (0) target = $region29
    $region28: #{context_encoder_forward.1} parent=1 // pred_region
      _
    $region29: #{context_encoder_forward.1} parent=1 // pred_fallthru
      _
    // Predicated region
    $region30: #{context_encoder_forward.1} parent=1 // pred_check
      _
    $region31: #{context_encoder_forward.1} parent=1 // pred_check_branch
      %35 = sbr.rel (0) target = $region33
    $region32: #{context_encoder_forward.1} parent=1 // pred_region
      _
    $region33: #{context_encoder_forward.1} parent=1 // pred_fallthru
      _
    // Predicated region
    $region34: #{context_encoder_forward.1} parent=1 // pred_check
      _
    $region35: #{context_encoder_forward.1} parent=1 // pred_check_branch
      %37 = sbr.rel (0) target = $region37
    $region36: #{context_encoder_forward.1} parent=1 // pred_region
      _
    $region37: #{context_encoder_forward.1} parent=1 // pred_fallthru
      _
    // Predicated region
    $region38: #{context_encoder_forward.1} parent=1 // pred_check
      _
    $region39: #{context_encoder_forward.1} parent=1 // pred_check_branch
      %39 = sbr.rel (0) target = $region41
    $region40: #{context_encoder_forward.1} parent=1 // pred_region
      _
    $region41: #{context_encoder_forward.1} parent=1 // pred_fallthru
      _
    // Predicated region
    $region42: #{context_encoder_forward.1} parent=1 // pred_check
      _
    $region43: #{context_encoder_forward.1} parent=1 // pred_check_branch
      %41 = sbr.rel (0) target = $region45
    $region44: #{context_encoder_forward.1} parent=1 // pred_region
      _
    $region45: #{context_encoder_forward.1} parent=1 // pred_fallthru
      _
    // Predicated region
    $region46: #{context_encoder_forward.1} parent=1 // pred_check
      _
    $region47: #{context_encoder_forward.1} parent=1 // pred_check_branch
      %43 = sbr.rel (0) target = $region49
    $region48: #{context_encoder_forward.1} parent=1 // pred_region
      _
    $region49: #{context_encoder_forward.1} parent=1 // pred_fallthru
      _
    // Predicated region
    $region50: #{context_encoder_forward.1} parent=1 // pred_check
      _
    $region51: #{context_encoder_forward.1} parent=1 // pred_check_branch
      %45 = sbr.rel (0) target = $region53
    $region52: #{context_encoder_forward.1} parent=1 // pred_region
      _
    $region53: #{context_encoder_forward.1} parent=1 // pred_fallthru
      _
    // Predicated region
    $region54: #{context_encoder_forward.1} parent=1 // pred_check
      _
    $region55: #{context_encoder_forward.1} parent=1 // pred_check_branch
      %47 = sbr.rel (0) target = $region57
    $region56: #{context_encoder_forward.1} parent=1 // pred_region
      _
    $region57: #{context_encoder_forward.1} parent=1 // pred_fallthru
      _
    %v49 = vld [vmem:[%s0] sm:$0xff]
    %v50 = vld [vmem:[%s0 + $0x8] sm:$0xff]
    %v51 = vld [vmem:[%s1] sm:$0xff]
    %v52 = vld [vmem:[%s1 + $0x8] sm:$0xff]
    %v53 = vld [vmem:[%s2] sm:$0x1]
    %v54 = vld [vmem:[%s3] sm:$0x1]
    %vm55 = vcmask 261120
    %v56 = vsel %vm55, %v49, 0.0
    %57 = vadd.xlane.f32.xlu0 %v56
    %v58 = vpop.xlane.xlu0 %57
    %v59 = vsel %vm55, %v50, 0.0
    %60 = vadd.xlane.f32.xlu0 %v59
    %v61 = vpop.xlane.xlu0 %60
    %v62 = vrcp.pop 32.0
    %v63 = vmul.f32 %v58, %v62
    %v64 = vmul.f32 %v61, %v62
    %v65 = vsub.f32 %v49, %v63
    %v66 = vsub.f32 %v50, %v64
    %v67 = vmul.f32 %v65, %v65
    %v68 = vmul.f32 %v66, %v66
    %v69 = vsel %vm55, %v67, 0.0
    %70 = vadd.xlane.f32.xlu0 %v69
    %v71 = vpop.xlane.xlu0 %70
    %v72 = vsel %vm55, %v68, 0.0
    %73 = vadd.xlane.f32.xlu0 %v72
    %v74 = vpop.xlane.xlu0 %73
    %v75 = vmul.f32 %v71, 0.032258064
    %v76 = vmul.f32 %v74, 0.032258064
    %v77 = vrsqrt.pop %v75
    %v78 = vmul.f32 %v75, %v77
    %vm79 = vcmp.eq.f32.partialorder %v75, inf
    %v80 = vsel %vm79, %v75, %v78
    %vm81 = vcmp.eq.f32.partialorder %v75, 0.0
    %v82 = vand.u32 %v75, 2147483648
    %v83 = vsel %vm81, %v82, %v80
    %v84 = vrsqrt.pop %v76
    %v85 = vmul.f32 %v76, %v84
    %vm86 = vcmp.eq.f32.partialorder %v76, inf
    %v87 = vsel %vm86, %v76, %v85
    %vm88 = vcmp.eq.f32.partialorder %v76, 0.0
    %v89 = vand.u32 %v76, 2147483648
    %v90 = vsel %vm88, %v89, %v87
    %v91 = vadd.f32 %v83, 1e-06
    %v92 = vadd.f32 %v90, 1e-06
    %v93 = vrcp.pop %v91
    %v94 = vrcp.pop %v92
    %v96 = vlaneseq
    %v97 = vshrl.u32 %v96, 7
    %v98 = vsub.s32 0, %v97
    %v99 = vrot.slane %v53, %v98
    %v101 = vmul.f32 %v99, %v65
    %v102 = vmul.f32 %v99, %v66
    %v103 = vmul.f32 %v101, %v93
    %v104 = vmul.f32 %v102, %v94
    %v106 = vlaneseq
    %v107 = vshrl.u32 %v106, 7
    %v108 = vsub.s32 0, %v107
    %v109 = vrot.slane %v54, %v108
    %v111 = vadd.f32 %v103, %v109
    %v112 = vadd.f32 %v104, %v109
    %v113 = vpack.c.bf16 %v112, %v111
    %v114 = vld [vmem:[%s4] sm:$0xf]
    %v115 = vld [vmem:[%s4 + $0x4] sm:$0xf]
    %v116 = vld [vmem:[%s4 + $0x8] sm:$0xf]
    %v117 = vld [vmem:[%s4 + $0xc] sm:$0xf]
    %v118 = vld [vmem:[%s5] sm:$0x1]
    %v120 = vlaneseq
    %v121 = vshrl.u32 %v120, 7
    %v122 = vsub.s32 0, %v121
    %v123 = vrot.slane %v118, %v122
    %v129 = vunpack.c.l.b16 %v114
    %v130 = vunpack.c.l.b16 %v115
    %v131 = vunpack.c.l.b16 %v116
    %v132 = vunpack.c.l.b16 %v117
    %v133 = vpack.c.b16 %v130, %v129
    %v134 = vpack.c.b16 %v132, %v131
    %v138 = vsel %vm55, %v113, 0
    %140 = vmatprep.subr.bf16.mxu0 0
    %141 = vmatpush1.bf16.msra.mxu0 %v133
    %142 = vmatprep.subr.bf16.mxu0 0
    %143 = vmatpush1.bf16.msra.mxu0 %v134
    %144 = vmatprep.subr.bf16.mxu0 0
    %145 = vmatpush1.bf16.msra.mxu0 0
    %146 = vmatprep.subr.bf16.mxu0 0
    %147 = vmatpush1.bf16.msra.mxu0 0
    %148 = vmatprep.subr.bf16.mxu0 0
    %149 = vmatpush1.bf16.msra.mxu0 0
    %150 = vmatprep.subr.bf16.mxu0 0
    %151 = vmatpush1.bf16.msra.mxu0 0
    %152 = vmatprep.subr.bf16.mxu0 0
    %153 = vmatpush1.bf16.msra.mxu0 0
    %154 = vmatprep.subr.bf16.mxu0 0
    %155 = vmatpush1.bf16.msra.mxu0 0
    %156 = vmatprep.subr.bf16.mxu0 0
    %157 = vmatpush1.bf16.msra.mxu0 0
    %158 = vmatprep.subr.bf16.mxu0 0
    %159 = vmatpush1.bf16.msra.mxu0 0
    %160 = vmatprep.subr.bf16.mxu0 0
    %161 = vmatpush1.bf16.msra.mxu0 0
    %162 = vmatprep.subr.bf16.mxu0 0
    %163 = vmatpush1.bf16.msra.mxu0 0
    %164 = vmatprep.subr.bf16.mxu0 0
    %165 = vmatpush1.bf16.msra.mxu0 0
    %166 = vmatprep.subr.bf16.mxu0 0
    %167 = vmatpush1.bf16.msra.mxu0 0
    %168 = vmatprep.subr.bf16.mxu0 0
    %169 = vmatpush1.bf16.msra.mxu0 0
    %170 = vmatprep.subr.bf16.mxu0 0
    %171 = vmatpush1.bf16.msra.mxu0 0
    %172 = vmatprep.mubr.bf16.mxu0 0
    %173 = vmatmul.mubr.bf16.gmra.mrb[0].mxu0 %v138
    %v174 = vpop.f32.mrb[0].mxu0
    %v175 = vadd.f32 %v123, %v174
    %v176 = vpop.f32.mrb[0].mxu0
    %v177 = vpop.f32.mrb[0].mxu0
    %v178 = vadd.f32 %v123, %v177
    %v179 = vpop.f32.mrb[0].mxu0
    %180 = vdwg.mxu0
    %v181 = vpack.c.bf16 %v178, %v175
    %183 = vrot.lane.b32.xlu0 %v181, 96
    %v184 = vpop.permute.xlu0 %183
    %vm185 = vcmask 64512
    %v187 = vsel %vm185, %v181, 0
    %v190 = vsel %vm185, %v184, 0
    %192 = vmatprep.subr.bf16.mxu0 0
    %193 = vmatpush1.bf16.xpose.msra.mxu0 %v190
    %194 = vmatprep.subr.bf16.mxu0 0
    %195 = vmatpush1.bf16.xpose.msra.mxu0 0
    %196 = vmatprep.subr.bf16.mxu0 0
    %197 = vmatpush1.bf16.xpose.msra.mxu0 0
    %198 = vmatprep.subr.bf16.mxu0 0
    %199 = vmatpush1.bf16.xpose.msra.mxu0 0
    %200 = vmatprep.subr.bf16.mxu0 0
    %201 = vmatpush1.bf16.xpose.msra.mxu0 0
    %202 = vmatprep.subr.bf16.mxu0 0
    %203 = vmatpush1.bf16.xpose.msra.mxu0 0
    %204 = vmatprep.subr.bf16.mxu0 0
    %205 = vmatpush1.bf16.xpose.msra.mxu0 0
    %206 = vmatprep.subr.bf16.mxu0 0
    %207 = vmatpush1.bf16.xpose.msra.mxu0 0
    %208 = vmatprep.subr.bf16.mxu0 0
    %209 = vmatpush1.bf16.xpose.msra.mxu0 0
    %210 = vmatprep.subr.bf16.mxu0 0
    %211 = vmatpush1.bf16.xpose.msra.mxu0 0
    %212 = vmatprep.subr.bf16.mxu0 0
    %213 = vmatpush1.bf16.xpose.msra.mxu0 0
    %214 = vmatprep.subr.bf16.mxu0 0
    %215 = vmatpush1.bf16.xpose.msra.mxu0 0
    %216 = vmatprep.subr.bf16.mxu0 0
    %217 = vmatpush1.bf16.xpose.msra.mxu0 0
    %218 = vmatprep.subr.bf16.mxu0 0
    %219 = vmatpush1.bf16.xpose.msra.mxu0 0
    %220 = vmatprep.subr.bf16.mxu0 0
    %221 = vmatpush1.bf16.xpose.msra.mxu0 0
    %222 = vmatprep.subr.bf16.mxu0 0
    %223 = vmatpush1.bf16.xpose.msra.mxu0 0
    %224 = vmatprep.mubr.bf16.mxu0 0
    %225 = vmatmul.mubr.bf16.gmra.mrb[0].mxu0 %v187
    %v226 = vpop.f32.mrb[0].mxu0
    %v227 = vadd.f32 0.0, %v226
    %v228 = vpop.f32.mrb[0].mxu0
    %v229 = vpop.f32.mrb[0].mxu0
    %v230 = vadd.f32 0.0, %v229
    %v231 = vpop.f32.mrb[0].mxu0
    %232 = vdwg.mxu0
    %v233 = vmul.f32 %v227, 0.35355338
    %v234 = vmul.f32 %v230, 0.35355338
    %vm235 = vcmp.eq.f32.partialorder %v51, 0.0
    %vm236 = vcmp.eq.f32.partialorder %v52, 0.0
    %v237 = vsel %vm235, %v233, %v51
    %v238 = vsel %vm236, %v234, %v52
    %vm239 = vcmask 130048
    %v240 = vsel %vm239, %v237, -inf
    %241 = vmax.xlane.f32.xlu0 %v240
    %v242 = vpop.xlane.xlu0 %241
    %v243 = vsel %vm239, %v238, -inf
    %244 = vmax.xlane.f32.xlu0 %v243
    %v245 = vpop.xlane.xlu0 %244
    %v246 = vsub.f32 %v237, %v242
    %v247 = vsub.f32 %v238, %v245
    %v248 = vmul.f32 %v246, 1.442695
    %v249 = vpow.pop %v248
    %v250 = vmul.f32 %v247, 1.442695
    %v251 = vpow.pop %v250
    %v252 = vsel %vm239, %v249, 0.0
    %253 = vadd.xlane.f32.xlu0 %v252
    %v254 = vpop.xlane.xlu0 %253
    %v255 = vsel %vm239, %v251, 0.0
    %256 = vadd.xlane.f32.xlu0 %v255
    %v257 = vpop.xlane.xlu0 %256
    %v258 = vrcp.pop %v254
    %v259 = vrcp.pop %v257
    %v260 = vmul.f32 %v249, %v258
    %v261 = vmul.f32 %v251, %v259
    %v262 = vpack.c.bf16 %v261, %v260
    %263 = vrot.lane.b32.xlu0 %v181, 64
    %v264 = vpop.permute.xlu0 %263
    %v267 = vsel %vm239, %v262, 0
    %269 = vmatprep.subr.bf16.mxu0 0
    %270 = vmatpush1.bf16.msra.mxu0 %v264
    %271 = vmatprep.subr.bf16.mxu0 0
    %272 = vmatpush1.bf16.msra.mxu0 0
    %273 = vmatprep.subr.bf16.mxu0 0
    %274 = vmatpush1.bf16.msra.mxu0 0
    %275 = vmatprep.subr.bf16.mxu0 0
    %276 = vmatpush1.bf16.msra.mxu0 0
    %277 = vmatprep.subr.bf16.mxu0 0
    %278 = vmatpush1.bf16.msra.mxu0 0
    %279 = vmatprep.subr.bf16.mxu0 0
    %280 = vmatpush1.bf16.msra.mxu0 0
    %281 = vmatprep.subr.bf16.mxu0 0
    %282 = vmatpush1.bf16.msra.mxu0 0
    %283 = vmatprep.subr.bf16.mxu0 0
    %284 = vmatpush1.bf16.msra.mxu0 0
    %285 = vmatprep.subr.bf16.mxu0 0
    %286 = vmatpush1.bf16.msra.mxu0 0
    %287 = vmatprep.subr.bf16.mxu0 0
    %288 = vmatpush1.bf16.msra.mxu0 0
    %289 = vmatprep.subr.bf16.mxu0 0
    %290 = vmatpush1.bf16.msra.mxu0 0
    %291 = vmatprep.subr.bf16.mxu0 0
    %292 = vmatpush1.bf16.msra.mxu0 0
    %293 = vmatprep.subr.bf16.mxu0 0
    %294 = vmatpush1.bf16.msra.mxu0 0
    %295 = vmatprep.subr.bf16.mxu0 0
    %296 = vmatpush1.bf16.msra.mxu0 0
    %297 = vmatprep.subr.bf16.mxu0 0
    %298 = vmatpush1.bf16.msra.mxu0 0
    %299 = vmatprep.subr.bf16.mxu0 0
    %300 = vmatpush1.bf16.msra.mxu0 0
    %301 = vmatprep.mubr.bf16.mxu0 0
    %302 = vmatmul.mubr.bf16.gmra.mrb[0].mxu0 %v267
    %v303 = vpop.f32.mrb[0].mxu0
    %v304 = vadd.f32 0.0, %v303
    %v305 = vpop.f32.mrb[0].mxu0
    %v306 = vpop.f32.mrb[0].mxu0
    %v307 = vadd.f32 0.0, %v306
    %v308 = vpop.f32.mrb[0].mxu0
    %309 = vdwg.mxu0
    %310 = vrot.lane.b32.xlu0 %v181, 120
    %v311 = vpop.permute.xlu0 %310
    %312 = vrot.lane.b32.xlu0 %v181, 88
    %v313 = vpop.permute.xlu0 %312
    %v315 = vsel %vm185, %v311, 0
    %v318 = vsel %vm185, %v313, 0
    %320 = vmatprep.subr.bf16.mxu0 0
    %321 = vmatpush1.bf16.xpose.msra.mxu0 %v318
    %322 = vmatprep.subr.bf16.mxu0 0
    %323 = vmatpush1.bf16.xpose.msra.mxu0 0
    %324 = vmatprep.subr.bf16.mxu0 0
    %325 = vmatpush1.bf16.xpose.msra.mxu0 0
    %326 = vmatprep.subr.bf16.mxu0 0
    %327 = vmatpush1.bf16.xpose.msra.mxu0 0
    %328 = vmatprep.subr.bf16.mxu0 0
    %329 = vmatpush1.bf16.xpose.msra.mxu0 0
    %330 = vmatprep.subr.bf16.mxu0 0
    %331 = vmatpush1.bf16.xpose.msra.mxu0 0
    %332 = vmatprep.subr.bf16.mxu0 0
    %333 = vmatpush1.bf16.xpose.msra.mxu0 0
    %334 = vmatprep.subr.bf16.mxu0 0
    %335 = vmatpush1.bf16.xpose.msra.mxu0 0
    %336 = vmatprep.subr.bf16.mxu0 0
    %337 = vmatpush1.bf16.xpose.msra.mxu0 0
    %338 = vmatprep.subr.bf16.mxu0 0
    %339 = vmatpush1.bf16.xpose.msra.mxu0 0
    %340 = vmatprep.subr.bf16.mxu0 0
    %341 = vmatpush1.bf16.xpose.msra.mxu0 0
    %342 = vmatprep.subr.bf16.mxu0 0
    %343 = vmatpush1.bf16.xpose.msra.mxu0 0
    %344 = vmatprep.subr.bf16.mxu0 0
    %345 = vmatpush1.bf16.xpose.msra.mxu0 0
    %346 = vmatprep.subr.bf16.mxu0 0
    %347 = vmatpush1.bf16.xpose.msra.mxu0 0
    %348 = vmatprep.subr.bf16.mxu0 0
    %349 = vmatpush1.bf16.xpose.msra.mxu0 0
    %350 = vmatprep.subr.bf16.mxu0 0
    %351 = vmatpush1.bf16.xpose.msra.mxu0 0
    %352 = vmatprep.mubr.bf16.mxu0 0
    %353 = vmatmul.mubr.bf16.gmra.mrb[0].mxu0 %v315
    %v354 = vpop.f32.mrb[0].mxu0
    %v355 = vadd.f32 0.0, %v354
    %v356 = vpop.f32.mrb[0].mxu0
    %v357 = vpop.f32.mrb[0].mxu0
    %v358 = vadd.f32 0.0, %v357
    %v359 = vpop.f32.mrb[0].mxu0
    %360 = vdwg.mxu0
    %v361 = vmul.f32 %v355, 0.35355338
    %v362 = vmul.f32 %v358, 0.35355338
    %v363 = vsel %vm235, %v361, %v51
    %v364 = vsel %vm236, %v362, %v52
    %v365 = vsel %vm239, %v363, -inf
    %366 = vmax.xlane.f32.xlu0 %v365
    %v367 = vpop.xlane.xlu0 %366
    %v368 = vsel %vm239, %v364, -inf
    %369 = vmax.xlane.f32.xlu0 %v368
    %v370 = vpop.xlane.xlu0 %369
    %v371 = vsub.f32 %v363, %v367
    %v372 = vsub.f32 %v364, %v370
    %v373 = vmul.f32 %v371, 1.442695
    %v374 = vpow.pop %v373
    %v375 = vmul.f32 %v372, 1.442695
    %v376 = vpow.pop %v375
    %v377 = vsel %vm239, %v374, 0.0
    %378 = vadd.xlane.f32.xlu0 %v377
    %v379 = vpop.xlane.xlu0 %378
    %v380 = vsel %vm239, %v376, 0.0
    %381 = vadd.xlane.f32.xlu0 %v380
    %v382 = vpop.xlane.xlu0 %381
    %v383 = vrcp.pop %v379
    %v384 = vrcp.pop %v382
    %v385 = vmul.f32 %v374, %v383
    %v386 = vmul.f32 %v376, %v384
    %v387 = vpack.c.bf16 %v386, %v385
    %388 = vrot.lane.b32.xlu0 %v181, 56
    %v389 = vpop.permute.xlu0 %388
    %v392 = vsel %vm239, %v387, 0
    %394 = vmatprep.subr.bf16.mxu0 0
    %395 = vmatpush1.bf16.msra.mxu0 %v389
    %396 = vmatprep.subr.bf16.mxu0 0
    %397 = vmatpush1.bf16.msra.mxu0 0
    %398 = vmatprep.subr.bf16.mxu0 0
    %399 = vmatpush1.bf16.msra.mxu0 0
    %400 = vmatprep.subr.bf16.mxu0 0
    %401 = vmatpush1.bf16.msra.mxu0 0
    %402 = vmatprep.subr.bf16.mxu0 0
    %403 = vmatpush1.bf16.msra.mxu0 0
    %404 = vmatprep.subr.bf16.mxu0 0
    %405 = vmatpush1.bf16.msra.mxu0 0
    %406 = vmatprep.subr.bf16.mxu0 0
    %407 = vmatpush1.bf16.msra.mxu0 0
    %408 = vmatprep.subr.bf16.mxu0 0
    %409 = vmatpush1.bf16.msra.mxu0 0
    %410 = vmatprep.subr.bf16.mxu0 0
    %411 = vmatpush1.bf16.msra.mxu0 0
    %412 = vmatprep.subr.bf16.mxu0 0
    %413 = vmatpush1.bf16.msra.mxu0 0
    %414 = vmatprep.subr.bf16.mxu0 0
    %415 = vmatpush1.bf16.msra.mxu0 0
    %416 = vmatprep.subr.bf16.mxu0 0
    %417 = vmatpush1.bf16.msra.mxu0 0
    %418 = vmatprep.subr.bf16.mxu0 0
    %419 = vmatpush1.bf16.msra.mxu0 0
    %420 = vmatprep.subr.bf16.mxu0 0
    %421 = vmatpush1.bf16.msra.mxu0 0
    %422 = vmatprep.subr.bf16.mxu0 0
    %423 = vmatpush1.bf16.msra.mxu0 0
    %424 = vmatprep.subr.bf16.mxu0 0
    %425 = vmatpush1.bf16.msra.mxu0 0
    %426 = vmatprep.mubr.bf16.mxu0 0
    %427 = vmatmul.mubr.bf16.gmra.mrb[0].mxu0 %v392
    %v428 = vpop.f32.mrb[0].mxu0
    %v429 = vadd.f32 0.0, %v428
    %v430 = vpop.f32.mrb[0].mxu0
    %v431 = vpop.f32.mrb[0].mxu0
    %v432 = vadd.f32 0.0, %v431
    %v433 = vpop.f32.mrb[0].mxu0
    %434 = vdwg.mxu0
    %435 = vrot.lane.b32.xlu0 %v181, 112
    %v436 = vpop.permute.xlu0 %435
    %437 = vrot.lane.b32.xlu0 %v181, 80
    %v438 = vpop.permute.xlu0 %437
    %v440 = vsel %vm185, %v436, 0
    %v443 = vsel %vm185, %v438, 0
    %445 = vmatprep.subr.bf16.mxu0 0
    %446 = vmatpush1.bf16.xpose.msra.mxu0 %v443
    %447 = vmatprep.subr.bf16.mxu0 0
    %448 = vmatpush1.bf16.xpose.msra.mxu0 0
    %449 = vmatprep.subr.bf16.mxu0 0
    %450 = vmatpush1.bf16.xpose.msra.mxu0 0
    %451 = vmatprep.subr.bf16.mxu0 0
    %452 = vmatpush1.bf16.xpose.msra.mxu0 0
    %453 = vmatprep.subr.bf16.mxu0 0
    %454 = vmatpush1.bf16.xpose.msra.mxu0 0
    %455 = vmatprep.subr.bf16.mxu0 0
    %456 = vmatpush1.bf16.xpose.msra.mxu0 0
    %457 = vmatprep.subr.bf16.mxu0 0
    %458 = vmatpush1.bf16.xpose.msra.mxu0 0
    %459 = vmatprep.subr.bf16.mxu0 0
    %460 = vmatpush1.bf16.xpose.msra.mxu0 0
    %461 = vmatprep.subr.bf16.mxu0 0
    %462 = vmatpush1.bf16.xpose.msra.mxu0 0
    %463 = vmatprep.subr.bf16.mxu0 0
    %464 = vmatpush1.bf16.xpose.msra.mxu0 0
    %465 = vmatprep.subr.bf16.mxu0 0
    %466 = vmatpush1.bf16.xpose.msra.mxu0 0
    %467 = vmatprep.subr.bf16.mxu0 0
    %468 = vmatpush1.bf16.xpose.msra.mxu0 0
    %469 = vmatprep.subr.bf16.mxu0 0
    %470 = vmatpush1.bf16.xpose.msra.mxu0 0
    %471 = vmatprep.subr.bf16.mxu0 0
    %472 = vmatpush1.bf16.xpose.msra.mxu0 0
    %473 = vmatprep.subr.bf16.mxu0 0
    %474 = vmatpush1.bf16.xpose.msra.mxu0 0
    %475 = vmatprep.subr.bf16.mxu0 0
    %476 = vmatpush1.bf16.xpose.msra.mxu0 0
    %477 = vmatprep.mubr.bf16.mxu0 0
    %478 = vmatmul.mubr.bf16.gmra.mrb[0].mxu0 %v440
    %v479 = vpop.f32.mrb[0].mxu0
    %v480 = vadd.f32 0.0, %v479
    %v481 = vpop.f32.mrb[0].mxu0
    %v482 = vpop.f32.mrb[0].mxu0
    %v483 = vadd.f32 0.0, %v482
    %v484 = vpop.f32.mrb[0].mxu0
    %485 = vdwg.mxu0
    %v486 = vmul.f32 %v480, 0.35355338
    %v487 = vmul.f32 %v483, 0.35355338
    %v488 = vsel %vm235, %v486, %v51
    %v489 = vsel %vm236, %v487, %v52
    %v490 = vsel %vm239, %v488, -inf
    %491 = vmax.xlane.f32.xlu0 %v490
    %v492 = vpop.xlane.xlu0 %491
    %v493 = vsel %vm239, %v489, -inf
    %494 = vmax.xlane.f32.xlu0 %v493
    %v495 = vpop.xlane.xlu0 %494
    %v496 = vsub.f32 %v488, %v492
    %v497 = vsub.f32 %v489, %v495
    %v498 = vmul.f32 %v496, 1.442695
    %v499 = vpow.pop %v498
    %v500 = vmul.f32 %v497, 1.442695
    %v501 = vpow.pop %v500
    %v502 = vsel %vm239, %v499, 0.0
    %503 = vadd.xlane.f32.xlu0 %v502
    %v504 = vpop.xlane.xlu0 %503
    %v505 = vsel %vm239, %v501, 0.0
    %506 = vadd.xlane.f32.xlu0 %v505
    %v507 = vpop.xlane.xlu0 %506
    %v508 = vrcp.pop %v504
    %v509 = vrcp.pop %v507
    %v510 = vmul.f32 %v499, %v508
    %v511 = vmul.f32 %v501, %v509
    %v512 = vpack.c.bf16 %v511, %v510
    %513 = vrot.lane.b32.xlu0 %v181, 48
    %v514 = vpop.permute.xlu0 %513
    %v517 = vsel %vm239, %v512, 0
    %519 = vmatprep.subr.bf16.mxu0 0
    %520 = vmatpush1.bf16.msra.mxu0 %v514
    %521 = vmatprep.subr.bf16.mxu0 0
    %522 = vmatpush1.bf16.msra.mxu0 0
    %523 = vmatprep.subr.bf16.mxu0 0
    %524 = vmatpush1.bf16.msra.mxu0 0
    %525 = vmatprep.subr.bf16.mxu0 0
    %526 = vmatpush1.bf16.msra.mxu0 0
    %527 = vmatprep.subr.bf16.mxu0 0
    %528 = vmatpush1.bf16.msra.mxu0 0
    %529 = vmatprep.subr.bf16.mxu0 0
    %530 = vmatpush1.bf16.msra.mxu0 0
    %531 = vmatprep.subr.bf16.mxu0 0
    %532 = vmatpush1.bf16.msra.mxu0 0
    %533 = vmatprep.subr.bf16.mxu0 0
    %534 = vmatpush1.bf16.msra.mxu0 0
    %535 = vmatprep.subr.bf16.mxu0 0
    %536 = vmatpush1.bf16.msra.mxu0 0
    %537 = vmatprep.subr.bf16.mxu0 0
    %538 = vmatpush1.bf16.msra.mxu0 0
    %539 = vmatprep.subr.bf16.mxu0 0
    %540 = vmatpush1.bf16.msra.mxu0 0
    %541 = vmatprep.subr.bf16.mxu0 0
    %542 = vmatpush1.bf16.msra.mxu0 0
    %543 = vmatprep.subr.bf16.mxu0 0
    %544 = vmatpush1.bf16.msra.mxu0 0
    %545 = vmatprep.subr.bf16.mxu0 0
    %546 = vmatpush1.bf16.msra.mxu0 0
    %547 = vmatprep.subr.bf16.mxu0 0
    %548 = vmatpush1.bf16.msra.mxu0 0
    %549 = vmatprep.subr.bf16.mxu0 0
    %550 = vmatpush1.bf16.msra.mxu0 0
    %551 = vmatprep.mubr.bf16.mxu0 0
    %552 = vmatmul.mubr.bf16.gmra.mrb[0].mxu0 %v517
    %v553 = vpop.f32.mrb[0].mxu0
    %v554 = vadd.f32 0.0, %v553
    %v555 = vpop.f32.mrb[0].mxu0
    %v556 = vpop.f32.mrb[0].mxu0
    %v557 = vadd.f32 0.0, %v556
    %v558 = vpop.f32.mrb[0].mxu0
    %559 = vdwg.mxu0
    %560 = vrot.lane.b32.xlu0 %v181, 104
    %v561 = vpop.permute.xlu0 %560
    %562 = vrot.lane.b32.xlu0 %v181, 72
    %v563 = vpop.permute.xlu0 %562
    %v565 = vsel %vm185, %v561, 0
    %v568 = vsel %vm185, %v563, 0
    %570 = vmatprep.subr.bf16.mxu0 0
    %571 = vmatpush1.bf16.xpose.msra.mxu0 %v568
    %572 = vmatprep.subr.bf16.mxu0 0
    %573 = vmatpush1.bf16.xpose.msra.mxu0 0
    %574 = vmatprep.subr.bf16.mxu0 0
    %575 = vmatpush1.bf16.xpose.msra.mxu0 0
    %576 = vmatprep.subr.bf16.mxu0 0
    %577 = vmatpush1.bf16.xpose.msra.mxu0 0
    %578 = vmatprep.subr.bf16.mxu0 0
    %579 = vmatpush1.bf16.xpose.msra.mxu0 0
    %580 = vmatprep.subr.bf16.mxu0 0
    %581 = vmatpush1.bf16.xpose.msra.mxu0 0
    %582 = vmatprep.subr.bf16.mxu0 0
    %583 = vmatpush1.bf16.xpose.msra.mxu0 0
    %584 = vmatprep.subr.bf16.mxu0 0
    %585 = vmatpush1.bf16.xpose.msra.mxu0 0
    %586 = vmatprep.subr.bf16.mxu0 0
    %587 = vmatpush1.bf16.xpose.msra.mxu0 0
    %588 = vmatprep.subr.bf16.mxu0 0
    %589 = vmatpush1.bf16.xpose.msra.mxu0 0
    %590 = vmatprep.subr.bf16.mxu0 0
    %591 = vmatpush1.bf16.xpose.msra.mxu0 0
    %592 = vmatprep.subr.bf16.mxu0 0
    %593 = vmatpush1.bf16.xpose.msra.mxu0 0
    %594 = vmatprep.subr.bf16.mxu0 0
    %595 = vmatpush1.bf16.xpose.msra.mxu0 0
    %596 = vmatprep.subr.bf16.mxu0 0
    %597 = vmatpush1.bf16.xpose.msra.mxu0 0
    %598 = vmatprep.subr.bf16.mxu0 0
    %599 = vmatpush1.bf16.xpose.msra.mxu0 0
    %600 = vmatprep.subr.bf16.mxu0 0
    %601 = vmatpush1.bf16.xpose.msra.mxu0 0
    %602 = vmatprep.mubr.bf16.mxu0 0
    %603 = vmatmul.mubr.bf16.gmra.mrb[0].mxu0 %v565
    %v604 = vpop.f32.mrb[0].mxu0
    %v605 = vadd.f32 0.0, %v604
    %v606 = vpop.f32.mrb[0].mxu0
    %v607 = vpop.f32.mrb[0].mxu0
    %v608 = vadd.f32 0.0, %v607
    %v609 = vpop.f32.mrb[0].mxu0
    %610 = vdwg.mxu0
    %v611 = vmul.f32 %v605, 0.35355338
    %v612 = vmul.f32 %v608, 0.35355338
    %v613 = vsel %vm235, %v611, %v51
    %v614 = vsel %vm236, %v612, %v52
    %v615 = vsel %vm239, %v613, -inf
    %616 = vmax.xlane.f32.xlu0 %v615
    %v617 = vpop.xlane.xlu0 %616
    %v618 = vsel %vm239, %v614, -inf
    %619 = vmax.xlane.f32.xlu0 %v618
    %v620 = vpop.xlane.xlu0 %619
    %v621 = vsub.f32 %v613, %v617
    %v622 = vsub.f32 %v614, %v620
    %v623 = vmul.f32 %v621, 1.442695
    %v624 = vpow.pop %v623
    %v625 = vmul.f32 %v622, 1.442695
    %v626 = vpow.pop %v625
    %v627 = vsel %vm239, %v624, 0.0
    %628 = vadd.xlane.f32.xlu0 %v627
    %v629 = vpop.xlane.xlu0 %628
    %v630 = vsel %vm239, %v626, 0.0
    %631 = vadd.xlane.f32.xlu0 %v630
    %v632 = vpop.xlane.xlu0 %631
    %v633 = vrcp.pop %v629
    %v634 = vrcp.pop %v632
    %v635 = vmul.f32 %v624, %v633
    %v636 = vmul.f32 %v626, %v634
    %v637 = vpack.c.bf16 %v636, %v635
    %638 = vrot.lane.b32.xlu0 %v181, 40
    %v639 = vpop.permute.xlu0 %638
    %v642 = vsel %vm239, %v637, 0
    %644 = vmatprep.subr.bf16.mxu0 0
    %645 = vmatpush1.bf16.msra.mxu0 %v639
    %646 = vmatprep.subr.bf16.mxu0 0
    %647 = vmatpush1.bf16.msra.mxu0 0
    %648 = vmatprep.subr.bf16.mxu0 0
    %649 = vmatpush1.bf16.msra.mxu0 0
    %650 = vmatprep.subr.bf16.mxu0 0
    %651 = vmatpush1.bf16.msra.mxu0 0
    %652 = vmatprep.subr.bf16.mxu0 0
    %653 = vmatpush1.bf16.msra.mxu0 0
    %654 = vmatprep.subr.bf16.mxu0 0
    %655 = vmatpush1.bf16.msra.mxu0 0
    %656 = vmatprep.subr.bf16.mxu0 0
    %657 = vmatpush1.bf16.msra.mxu0 0
    %658 = vmatprep.subr.bf16.mxu0 0
    %659 = vmatpush1.bf16.msra.mxu0 0
    %660 = vmatprep.subr.bf16.mxu0 0
    %661 = vmatpush1.bf16.msra.mxu0 0
    %662 = vmatprep.subr.bf16.mxu0 0
    %663 = vmatpush1.bf16.msra.mxu0 0
    %664 = vmatprep.subr.bf16.mxu0 0
    %665 = vmatpush1.bf16.msra.mxu0 0
    %666 = vmatprep.subr.bf16.mxu0 0
    %667 = vmatpush1.bf16.msra.mxu0 0
    %668 = vmatprep.subr.bf16.mxu0 0
    %669 = vmatpush1.bf16.msra.mxu0 0
    %670 = vmatprep.subr.bf16.mxu0 0
    %671 = vmatpush1.bf16.msra.mxu0 0
    %672 = vmatprep.subr.bf16.mxu0 0
    %673 = vmatpush1.bf16.msra.mxu0 0
    %674 = vmatprep.subr.bf16.mxu0 0
    %675 = vmatpush1.bf16.msra.mxu0 0
    %676 = vmatprep.mubr.bf16.mxu0 0
    %677 = vmatmul.mubr.bf16.gmra.mrb[0].mxu0 %v642
    %v678 = vpop.f32.mrb[0].mxu0
    %v679 = vadd.f32 0.0, %v678
    %v680 = vpop.f32.mrb[0].mxu0
    %v681 = vpop.f32.mrb[0].mxu0
    %v682 = vadd.f32 0.0, %v681
    %v683 = vpop.f32.mrb[0].mxu0
    %684 = vdwg.mxu0
    %687 = vrot.lane.b32.xlu0 %v429, 8
    %v688 = vpop.permute.xlu0 %687
    %689 = vrot.lane.b32.xlu0 %v432, 8
    %v690 = vpop.permute.xlu0 %689
    %695 = vrot.lane.b32.xlu0 %v554, 16
    %v696 = vpop.permute.xlu0 %695
    %697 = vrot.lane.b32.xlu0 %v557, 16
    %v698 = vpop.permute.xlu0 %697
    %703 = vrot.lane.b32.xlu0 %v679, 24
    %v704 = vpop.permute.xlu0 %703
    %705 = vrot.lane.b32.xlu0 %v682, 24
    %v706 = vpop.permute.xlu0 %705
    %v709 = vsel %vm185, %v304, %v688
    %v710 = vsel %vm185, %v307, %v690
    %v711 = vsel %vm239, %v709, %v696
    %v712 = vsel %vm239, %v710, %v698
    %vm713 = vcmask 195584
    %v714 = vsel %vm713, %v711, %v704
    %v715 = vsel %vm713, %v712, %v706
    %v716 = vpack.c.bf16 %v715, %v714
    %v717 = vld [vmem:[%s6] sm:$0xf]
    %v718 = vld [vmem:[%s6 + $0x4] sm:$0xf]
    %v719 = vld [vmem:[%s6 + $0x8] sm:$0xf]
    %v720 = vld [vmem:[%s6 + $0xc] sm:$0xf]
    %v721 = vld [vmem:[%s7] sm:$0x1]
    %v723 = vlaneseq
    %v724 = vshrl.u32 %v723, 7
    %v725 = vsub.s32 0, %v724
    %v726 = vrot.slane %v721, %v725
    %v732 = vunpack.c.l.b16 %v717
    %v733 = vunpack.c.l.b16 %v718
    %v734 = vunpack.c.l.b16 %v719
    %v735 = vunpack.c.l.b16 %v720
    %v736 = vpack.c.b16 %v733, %v732
    %v737 = vpack.c.b16 %v735, %v734
    %v741 = vsel %vm55, %v716, 0
    %743 = vmatprep.subr.bf16.mxu0 0
    %744 = vmatpush1.bf16.msra.mxu0 %v736
    %745 = vmatprep.subr.bf16.mxu0 0
    %746 = vmatpush1.bf16.msra.mxu0 %v737
    %747 = vmatprep.subr.bf16.mxu0 0
    %748 = vmatpush1.bf16.msra.mxu0 0
    %749 = vmatprep.subr.bf16.mxu0 0
    %750 = vmatpush1.bf16.msra.mxu0 0
    %751 = vmatprep.subr.bf16.mxu0 0
    %752 = vmatpush1.bf16.msra.mxu0 0
    %753 = vmatprep.subr.bf16.mxu0 0
    %754 = vmatpush1.bf16.msra.mxu0 0
    %755 = vmatprep.subr.bf16.mxu0 0
    %756 = vmatpush1.bf16.msra.mxu0 0
    %757 = vmatprep.subr.bf16.mxu0 0
    %758 = vmatpush1.bf16.msra.mxu0 0
    %759 = vmatprep.subr.bf16.mxu0 0
    %760 = vmatpush1.bf16.msra.mxu0 0
    %761 = vmatprep.subr.bf16.mxu0 0
    %762 = vmatpush1.bf16.msra.mxu0 0
    %763 = vmatprep.subr.bf16.mxu0 0
    %764 = vmatpush1.bf16.msra.mxu0 0
    %765 = vmatprep.subr.bf16.mxu0 0
    %766 = vmatpush1.bf16.msra.mxu0 0
    %767 = vmatprep.subr.bf16.mxu0 0
    %768 = vmatpush1.bf16.msra.mxu0 0
    %769 = vmatprep.subr.bf16.mxu0 0
    %770 = vmatpush1.bf16.msra.mxu0 0
    %771 = vmatprep.subr.bf16.mxu0 0
    %772 = vmatpush1.bf16.msra.mxu0 0
    %773 = vmatprep.subr.bf16.mxu0 0
    %774 = vmatpush1.bf16.msra.mxu0 0
    %775 = vmatprep.mubr.bf16.mxu0 0
    %776 = vmatmul.mubr.bf16.gmra.mrb[0].mxu0 %v741
    %v777 = vpop.f32.mrb[0].mxu0
    %v778 = vadd.f32 %v726, %v777
    %v779 = vpop.f32.mrb[0].mxu0
    %v780 = vpop.f32.mrb[0].mxu0
    %v781 = vadd.f32 %v726, %v780
    %v782 = vpop.f32.mrb[0].mxu0
    %783 = vdwg.mxu0
    %v784 = vadd.f32 %v49, %v778
    %v785 = vadd.f32 %v50, %v781
    %v786 = vld [vmem:[%s8] sm:$0x1]
    %v787 = vld [vmem:[%s9] sm:$0x1]
    %v788 = vsel %vm55, %v784, 0.0
    %789 = vadd.xlane.f32.xlu0 %v788
    %v790 = vpop.xlane.xlu0 %789
    %v791 = vsel %vm55, %v785, 0.0
    %792 = vadd.xlane.f32.xlu0 %v791
    %v793 = vpop.xlane.xlu0 %792
    %v794 = vmul.f32 %v790, %v62
    %v795 = vmul.f32 %v793, %v62
    %v796 = vsub.f32 %v784, %v794
    %v797 = vsub.f32 %v785, %v795
    %v798 = vmul.f32 %v796, %v796
    %v799 = vmul.f32 %v797, %v797
    %v800 = vsel %vm55, %v798, 0.0
    %801 = vadd.xlane.f32.xlu0 %v800
    %v802 = vpop.xlane.xlu0 %801
    %v803 = vsel %vm55, %v799, 0.0
    %804 = vadd.xlane.f32.xlu0 %v803
    %v805 = vpop.xlane.xlu0 %804
    %v806 = vmul.f32 %v802, 0.032258064
    %v807 = vmul.f32 %v805, 0.032258064
    %v808 = vrsqrt.pop %v806
    %v809 = vmul.f32 %v806, %v808
    %vm810 = vcmp.eq.f32.partialorder %v806, inf
    %v811 = vsel %vm810, %v806, %v809
    %vm812 = vcmp.eq.f32.partialorder %v806, 0.0
    %v813 = vand.u32 %v806, 2147483648
    %v814 = vsel %vm812, %v813, %v811
    %v815 = vrsqrt.pop %v807
    %v816 = vmul.f32 %v807, %v815
    %vm817 = vcmp.eq.f32.partialorder %v807, inf
    %v818 = vsel %vm817, %v807, %v816
    %vm819 = vcmp.eq.f32.partialorder %v807, 0.0
    %v820 = vand.u32 %v807, 2147483648
    %v821 = vsel %vm819, %v820, %v818
    %v822 = vadd.f32 %v814, 1e-06
    %v823 = vadd.f32 %v821, 1e-06
    %v824 = vrcp.pop %v822
    %v825 = vrcp.pop %v823
    %v827 = vlaneseq
    %v828 = vshrl.u32 %v827, 7
    %v829 = vsub.s32 0, %v828
    %v830 = vrot.slane %v786, %v829
    %v832 = vmul.f32 %v830, %v796
    %v833 = vmul.f32 %v830, %v797
    %v834 = vmul.f32 %v832, %v824
    %v835 = vmul.f32 %v833, %v825
    %v837 = vlaneseq
    %v838 = vshrl.u32 %v837, 7
    %v839 = vsub.s32 0, %v838
    %v840 = vrot.slane %v787, %v839
    %v842 = vadd.f32 %v834, %v840
    %v843 = vadd.f32 %v835, %v840
    %v844 = vpack.c.bf16 %v843, %v842
    %v845 = vld [vmem:[%s10] sm:$0xf]
    %v846 = vld [vmem:[%s10 + $0x4] sm:$0xf]
    %v847 = vld [vmem:[%s10 + $0x8] sm:$0xf]
    %v848 = vld [vmem:[%s10 + $0xc] sm:$0xf]
    %v849 = vld [vmem:[%s11] sm:$0x1]
    %v851 = vlaneseq
    %v852 = vshrl.u32 %v851, 7
    %v853 = vsub.s32 0, %v852
    %v854 = vrot.slane %v849, %v853
    %v860 = vunpack.c.l.b16 %v845
    %v861 = vunpack.c.l.b16 %v846
    %v862 = vunpack.c.l.b16 %v847
    %v863 = vunpack.c.l.b16 %v848
    %v864 = vpack.c.b16 %v861, %v860
    %v865 = vpack.c.b16 %v863, %v862
    %v869 = vsel %vm55, %v844, 0
    %871 = vmatprep.subr.bf16.mxu0 0
    %872 = vmatpush1.bf16.msra.mxu0 %v864
    %873 = vmatprep.subr.bf16.mxu0 0
    %874 = vmatpush1.bf16.msra.mxu0 %v865
    %875 = vmatprep.subr.bf16.mxu0 0
    %876 = vmatpush1.bf16.msra.mxu0 0
    %877 = vmatprep.subr.bf16.mxu0 0
    %878 = vmatpush1.bf16.msra.mxu0 0
    %879 = vmatprep.subr.bf16.mxu0 0
    %880 = vmatpush1.bf16.msra.mxu0 0
    %881 = vmatprep.subr.bf16.mxu0 0
    %882 = vmatpush1.bf16.msra.mxu0 0
    %883 = vmatprep.subr.bf16.mxu0 0
    %884 = vmatpush1.bf16.msra.mxu0 0
    %885 = vmatprep.subr.bf16.mxu0 0
    %886 = vmatpush1.bf16.msra.mxu0 0
    %887 = vmatprep.subr.bf16.mxu0 0
    %888 = vmatpush1.bf16.msra.mxu0 0
    %889 = vmatprep.subr.bf16.mxu0 0
    %890 = vmatpush1.bf16.msra.mxu0 0
    %891 = vmatprep.subr.bf16.mxu0 0
    %892 = vmatpush1.bf16.msra.mxu0 0
    %893 = vmatprep.subr.bf16.mxu0 0
    %894 = vmatpush1.bf16.msra.mxu0 0
    %895 = vmatprep.subr.bf16.mxu0 0
    %896 = vmatpush1.bf16.msra.mxu0 0
    %897 = vmatprep.subr.bf16.mxu0 0
    %898 = vmatpush1.bf16.msra.mxu0 0
    %899 = vmatprep.subr.bf16.mxu0 0
    %900 = vmatpush1.bf16.msra.mxu0 0
    %901 = vmatprep.subr.bf16.mxu0 0
    %902 = vmatpush1.bf16.msra.mxu0 0
    %903 = vmatprep.mubr.bf16.mxu0 0
    %904 = vmatmul.mubr.bf16.gmra.mrb[0].mxu0 %v869
    %v905 = vpop.f32.mrb[0].mxu0
    %v906 = vadd.f32 %v854, %v905
    %v907 = vpop.f32.mrb[0].mxu0
    %v908 = vpop.f32.mrb[0].mxu0
    %v909 = vadd.f32 %v854, %v908
    %v910 = vpop.f32.mrb[0].mxu0
    %911 = vdwg.mxu0
    %v912 = vmul.f32 %v906, 0.5
    %v913 = vmul.f32 %v909, 0.5
    %v914 = vmul.f32 %v906, 0.044715
    %v915 = vmul.f32 %v909, 0.044715
    %v916 = vmul.f32 %v914, %v906
    %v917 = vmul.f32 %v915, %v909
    %v918 = vmul.f32 %v916, %v906
    %v919 = vmul.f32 %v917, %v909
    %v920 = vadd.f32 %v906, %v918
    %v921 = vadd.f32 %v909, %v919
    %v922 = vmul.f32 %v920, 0.7978846
    %v923 = vmul.f32 %v921, 0.7978846
    %v924 = vtanh.pop %v922
    %v925 = vtanh.pop %v923
    %v926 = vadd.f32 %v924, 1.0
    %v927 = vadd.f32 %v925, 1.0
    %v928 = vmul.f32 %v912, %v926
    %v929 = vmul.f32 %v913, %v927
    %v930 = vpack.c.bf16 %v929, %v928
    %v931 = vld [vmem:[%s12] sm:$0xf]
    %v932 = vld [vmem:[%s12 + $0x4] sm:$0xf]
    %v933 = vld [vmem:[%s12 + $0x8] sm:$0xf]
    %v934 = vld [vmem:[%s12 + $0xc] sm:$0xf]
    %v935 = vld [vmem:[%s12 + $0x10] sm:$0xf]
    %v936 = vld [vmem:[%s12 + $0x14] sm:$0xf]
    %v937 = vld [vmem:[%s12 + $0x18] sm:$0xf]
    %v938 = vld [vmem:[%s12 + $0x1c] sm:$0xf]
    %v939 = vld [vmem:[%s12 + $0x20] sm:$0xf]
    %v940 = vld [vmem:[%s12 + $0x24] sm:$0xf]
    %v941 = vld [vmem:[%s12 + $0x28] sm:$0xf]
    %v942 = vld [vmem:[%s12 + $0x2c] sm:$0xf]
    %v943 = vld [vmem:[%s12 + $0x30] sm:$0xf]
    %v944 = vld [vmem:[%s12 + $0x34] sm:$0xf]
    %v945 = vld [vmem:[%s12 + $0x38] sm:$0xf]
    %v946 = vld [vmem:[%s12 + $0x3c] sm:$0xf]
    %v947 = vld [vmem:[%s13] sm:$0x1]
    %v949 = vlaneseq
    %v950 = vshrl.u32 %v949, 7
    %v951 = vsub.s32 0, %v950
    %v952 = vrot.slane %v947, %v951
    %v970 = vunpack.c.l.b16 %v931
    %v971 = vunpack.c.l.b16 %v932
    %v972 = vunpack.c.l.b16 %v933
    %v973 = vunpack.c.l.b16 %v934
    %v974 = vunpack.c.l.b16 %v935
    %v975 = vunpack.c.l.b16 %v936
    %v976 = vunpack.c.l.b16 %v937
    %v977 = vunpack.c.l.b16 %v938
    %v978 = vunpack.c.l.b16 %v939
    %v979 = vunpack.c.l.b16 %v940
    %v980 = vunpack.c.l.b16 %v941
    %v981 = vunpack.c.l.b16 %v942
    %v982 = vunpack.c.l.b16 %v943
    %v983 = vunpack.c.l.b16 %v944
    %v984 = vunpack.c.l.b16 %v945
    %v985 = vunpack.c.l.b16 %v946
    %v986 = vpack.c.b16 %v971, %v970
    %v987 = vpack.c.b16 %v973, %v972
    %v988 = vpack.c.b16 %v975, %v974
    %v989 = vpack.c.b16 %v977, %v976
    %v990 = vpack.c.b16 %v979, %v978
    %v991 = vpack.c.b16 %v981, %v980
    %v992 = vpack.c.b16 %v983, %v982
    %v993 = vpack.c.b16 %v985, %v984
    %1002 = vmatprep.subr.bf16.mxu0 0
    %1003 = vmatpush1.bf16.msra.mxu0 %v986
    %1004 = vmatprep.subr.bf16.mxu0 0
    %1005 = vmatpush1.bf16.msra.mxu0 %v987
    %1006 = vmatprep.subr.bf16.mxu0 0
    %1007 = vmatpush1.bf16.msra.mxu0 %v988
    %1008 = vmatprep.subr.bf16.mxu0 0
    %1009 = vmatpush1.bf16.msra.mxu0 %v989
    %1010 = vmatprep.subr.bf16.mxu0 0
    %1011 = vmatpush1.bf16.msra.mxu0 %v990
    %1012 = vmatprep.subr.bf16.mxu0 0
    %1013 = vmatpush1.bf16.msra.mxu0 %v991
    %1014 = vmatprep.subr.bf16.mxu0 0
    %1015 = vmatpush1.bf16.msra.mxu0 %v992
    %1016 = vmatprep.subr.bf16.mxu0 0
    %1017 = vmatpush1.bf16.msra.mxu0 %v993
    %1018 = vmatprep.subr.bf16.mxu0 0
    %1019 = vmatpush1.bf16.msra.mxu0 0
    %1020 = vmatprep.subr.bf16.mxu0 0
    %1021 = vmatpush1.bf16.msra.mxu0 0
    %1022 = vmatprep.subr.bf16.mxu0 0
    %1023 = vmatpush1.bf16.msra.mxu0 0
    %1024 = vmatprep.subr.bf16.mxu0 0
    %1025 = vmatpush1.bf16.msra.mxu0 0
    %1026 = vmatprep.subr.bf16.mxu0 0
    %1027 = vmatpush1.bf16.msra.mxu0 0
    %1028 = vmatprep.subr.bf16.mxu0 0
    %1029 = vmatpush1.bf16.msra.mxu0 0
    %1030 = vmatprep.subr.bf16.mxu0 0
    %1031 = vmatpush1.bf16.msra.mxu0 0
    %1032 = vmatprep.subr.bf16.mxu0 0
    %1033 = vmatpush1.bf16.msra.mxu0 0
    %1034 = vmatprep.mubr.bf16.mxu0 0
    %1035 = vmatmul.mubr.bf16.gmra.mrb[0].mxu0 %v930
    %v1036 = vpop.f32.mrb[0].mxu0
    %v1037 = vadd.f32 %v952, %v1036
    %v1038 = vpop.f32.mrb[0].mxu0
    %v1039 = vpop.f32.mrb[0].mxu0
    %v1040 = vadd.f32 %v952, %v1039
    %v1041 = vpop.f32.mrb[0].mxu0
    %1042 = vdwg.mxu0
    %v1043 = vadd.f32 %v784, %v1037
    %v1044 = vadd.f32 %v785, %v1040
    %s1045 = scalar_lea.vmem %s2, 1
    %v1046 = vld [vmem:[%s1045] sm:$0x1]
    %s1047 = scalar_lea.vmem %s3, 1
    %v1048 = vld [vmem:[%s1047] sm:$0x1]
    %v1049 = vsel %vm55, %v1043, 0.0
    %1050 = vadd.xlane.f32.xlu0 %v1049
    %v1051 = vpop.xlane.xlu0 %1050
    %v1052 = vsel %vm55, %v1044, 0.0
    %1053 = vadd.xlane.f32.xlu0 %v1052
    %v1054 = vpop.xlane.xlu0 %1053
    %v1055 = vmul.f32 %v1051, %v62
    %v1056 = vmul.f32 %v1054, %v62
    %v1057 = vsub.f32 %v1043, %v1055
    %v1058 = vsub.f32 %v1044, %v1056
    %v1059 = vmul.f32 %v1057, %v1057
    %v1060 = vmul.f32 %v1058, %v1058
    %v1061 = vsel %vm55, %v1059, 0.0
    %1062 = vadd.xlane.f32.xlu0 %v1061
    %v1063 = vpop.xlane.xlu0 %1062
    %v1064 = vsel %vm55, %v1060, 0.0
    %1065 = vadd.xlane.f32.xlu0 %v1064
    %v1066 = vpop.xlane.xlu0 %1065
    %v1067 = vmul.f32 %v1063, 0.032258064
    %v1068 = vmul.f32 %v1066, 0.032258064
    %v1069 = vrsqrt.pop %v1067
    %v1070 = vmul.f32 %v1067, %v1069
    %vm1071 = vcmp.eq.f32.partialorder %v1067, inf
    %v1072 = vsel %vm1071, %v1067, %v1070
    %vm1073 = vcmp.eq.f32.partialorder %v1067, 0.0
    %v1074 = vand.u32 %v1067, 2147483648
    %v1075 = vsel %vm1073, %v1074, %v1072
    %v1076 = vrsqrt.pop %v1068
    %v1077 = vmul.f32 %v1068, %v1076
    %vm1078 = vcmp.eq.f32.partialorder %v1068, inf
    %v1079 = vsel %vm1078, %v1068, %v1077
    %vm1080 = vcmp.eq.f32.partialorder %v1068, 0.0
    %v1081 = vand.u32 %v1068, 2147483648
    %v1082 = vsel %vm1080, %v1081, %v1079
    %v1083 = vadd.f32 %v1075, 1e-06
    %v1084 = vadd.f32 %v1082, 1e-06
    %v1085 = vrcp.pop %v1083
    %v1086 = vrcp.pop %v1084
    %v1088 = vlaneseq
    %v1089 = vshrl.u32 %v1088, 7
    %v1090 = vsub.s32 0, %v1089
    %v1091 = vrot.slane %v1046, %v1090
    %v1093 = vmul.f32 %v1091, %v1057
    %v1094 = vmul.f32 %v1091, %v1058
    %v1095 = vmul.f32 %v1093, %v1085
    %v1096 = vmul.f32 %v1094, %v1086
    %v1098 = vlaneseq
    %v1099 = vshrl.u32 %v1098, 7
    %v1100 = vsub.s32 0, %v1099
    %v1101 = vrot.slane %v1048, %v1100
    %v1103 = vadd.f32 %v1095, %v1101
    %v1104 = vadd.f32 %v1096, %v1101
    %v1105 = vpack.c.bf16 %v1104, %v1103
    %s1106 = scalar_lea.vmem %s4, 16
    %v1107 = vld [vmem:[%s1106] sm:$0xf]
    %v1108 = vld [vmem:[%s1106 + $0x4] sm:$0xf]
    %v1109 = vld [vmem:[%s1106 + $0x8] sm:$0xf]
    %v1110 = vld [vmem:[%s1106 + $0xc] sm:$0xf]
    %s1111 = scalar_lea.vmem %s5, 1
    %v1112 = vld [vmem:[%s1111] sm:$0x1]
    %v1114 = vlaneseq
    %v1115 = vshrl.u32 %v1114, 7
    %v1116 = vsub.s32 0, %v1115
    %v1117 = vrot.slane %v1112, %v1116
    %v1123 = vunpack.c.l.b16 %v1107
    %v1124 = vunpack.c.l.b16 %v1108
    %v1125 = vunpack.c.l.b16 %v1109
    %v1126 = vunpack.c.l.b16 %v1110
    %v1127 = vpack.c.b16 %v1124, %v1123
    %v1128 = vpack.c.b16 %v1126, %v1125
    %v1132 = vsel %vm55, %v1105, 0
    %1134 = vmatprep.subr.bf16.mxu0 0
    %1135 = vmatpush1.bf16.msra.mxu0 %v1127
    %1136 = vmatprep.subr.bf16.mxu0 0
    %1137 = vmatpush1.bf16.msra.mxu0 %v1128
    %1138 = vmatprep.subr.bf16.mxu0 0
    %1139 = vmatpush1.bf16.msra.mxu0 0
    %1140 = vmatprep.subr.bf16.mxu0 0
    %1141 = vmatpush1.bf16.msra.mxu0 0
    %1142 = vmatprep.subr.bf16.mxu0 0
    %1143 = vmatpush1.bf16.msra.mxu0 0
    %1144 = vmatprep.subr.bf16.mxu0 0
    %1145 = vmatpush1.bf16.msra.mxu0 0
    %1146 = vmatprep.subr.bf16.mxu0 0
    %1147 = vmatpush1.bf16.msra.mxu0 0
    %1148 = vmatprep.subr.bf16.mxu0 0
    %1149 = vmatpush1.bf16.msra.mxu0 0
    %1150 = vmatprep.subr.bf16.mxu0 0
    %1151 = vmatpush1.bf16.msra.mxu0 0
    %1152 = vmatprep.subr.bf16.mxu0 0
    %1153 = vmatpush1.bf16.msra.mxu0 0
    %1154 = vmatprep.subr.bf16.mxu0 0
    %1155 = vmatpush1.bf16.msra.mxu0 0
    %1156 = vmatprep.subr.bf16.mxu0 0
    %1157 = vmatpush1.bf16.msra.mxu0 0
    %1158 = vmatprep.subr.bf16.mxu0 0
    %1159 = vmatpush1.bf16.msra.mxu0 0
    %1160 = vmatprep.subr.bf16.mxu0 0
    %1161 = vmatpush1.bf16.msra.mxu0 0
    %1162 = vmatprep.subr.bf16.mxu0 0
    %1163 = vmatpush1.bf16.msra.mxu0 0
    %1164 = vmatprep.subr.bf16.mxu0 0
    %1165 = vmatpush1.bf16.msra.mxu0 0
    %1166 = vmatprep.mubr.bf16.mxu0 0
    %1167 = vmatmul.mubr.bf16.gmra.mrb[0].mxu0 %v1132
    %v1168 = vpop.f32.mrb[0].mxu0
    %v1169 = vadd.f32 %v1117, %v1168
    %v1170 = vpop.f32.mrb[0].mxu0
    %v1171 = vpop.f32.mrb[0].mxu0
    %v1172 = vadd.f32 %v1117, %v1171
    %v1173 = vpop.f32.mrb[0].mxu0
    %1174 = vdwg.mxu0
    %v1175 = vpack.c.bf16 %v1172, %v1169
    %1177 = vrot.lane.b32.xlu0 %v1175, 96
    %v1178 = vpop.permute.xlu0 %1177
    %v1180 = vsel %vm185, %v1175, 0
    %v1183 = vsel %vm185, %v1178, 0
    %1185 = vmatprep.subr.bf16.mxu0 0
    %1186 = vmatpush1.bf16.xpose.msra.mxu0 %v1183
    %1187 = vmatprep.subr.bf16.mxu0 0
    %1188 = vmatpush1.bf16.xpose.msra.mxu0 0
    %1189 = vmatprep.subr.bf16.mxu0 0
    %1190 = vmatpush1.bf16.xpose.msra.mxu0 0
    %1191 = vmatprep.subr.bf16.mxu0 0
    %1192 = vmatpush1.bf16.xpose.msra.mxu0 0
    %1193 = vmatprep.subr.bf16.mxu0 0
    %1194 = vmatpush1.bf16.xpose.msra.mxu0 0
    %1195 = vmatprep.subr.bf16.mxu0 0
    %1196 = vmatpush1.bf16.xpose.msra.mxu0 0
    %1197 = vmatprep.subr.bf16.mxu0 0
    %1198 = vmatpush1.bf16.xpose.msra.mxu0 0
    %1199 = vmatprep.subr.bf16.mxu0 0
    %1200 = vmatpush1.bf16.xpose.msra.mxu0 0
    %1201 = vmatprep.subr.bf16.mxu0 0
    %1202 = vmatpush1.bf16.xpose.msra.mxu0 0
    %1203 = vmatprep.subr.bf16.mxu0 0
    %1204 = vmatpush1.bf16.xpose.msra.mxu0 0
    %1205 = vmatprep.subr.bf16.mxu0 0
    %1206 = vmatpush1.bf16.xpose.msra.mxu0 0
    %1207 = vmatprep.subr.bf16.mxu0 0
    %1208 = vmatpush1.bf16.xpose.msra.mxu0 0
    %1209 = vmatprep.subr.bf16.mxu0 0
    %1210 = vmatpush1.bf16.xpose.msra.mxu0 0
    %1211 = vmatprep.subr.bf16.mxu0 0
    %1212 = vmatpush1.bf16.xpose.msra.mxu0 0
    %1213 = vmatprep.subr.bf16.mxu0 0
    %1214 = vmatpush1.bf16.xpose.msra.mxu0 0
    %1215 = vmatprep.subr.bf16.mxu0 0
    %1216 = vmatpush1.bf16.xpose.msra.mxu0 0
    %1217 = vmatprep.mubr.bf16.mxu0 0
    %1218 = vmatmul.mubr.bf16.gmra.mrb[0].mxu0 %v1180
    %v1219 = vpop.f32.mrb[0].mxu0
    %v1220 = vadd.f32 0.0, %v1219
    %v1221 = vpop.f32.mrb[0].mxu0
    %v1222 = vpop.f32.mrb[0].mxu0
    %v1223 = vadd.f32 0.0, %v1222
    %v1224 = vpop.f32.mrb[0].mxu0
    %1225 = vdwg.mxu0
    %v1226 = vmul.f32 %v1220, 0.35355338
    %v1227 = vmul.f32 %v1223, 0.35355338
    %v1228 = vsel %vm235, %v1226, %v51
    %v1229 = vsel %vm236, %v1227, %v52
    %v1230 = vsel %vm239, %v1228, -inf
    %1231 = vmax.xlane.f32.xlu0 %v1230
    %v1232 = vpop.xlane.xlu0 %1231
    %v1233 = vsel %vm239, %v1229, -inf
    %1234 = vmax.xlane.f32.xlu0 %v1233
    %v1235 = vpop.xlane.xlu0 %1234
    %v1236 = vsub.f32 %v1228, %v1232
    %v1237 = vsub.f32 %v1229, %v1235
    %v1238 = vmul.f32 %v1236, 1.442695
    %v1239 = vpow.pop %v1238
    %v1240 = vmul.f32 %v1237, 1.442695
    %v1241 = vpow.pop %v1240
    %v1242 = vsel %vm239, %v1239, 0.0
    %1243 = vadd.xlane.f32.xlu0 %v1242
    %v1244 = vpop.xlane.xlu0 %1243
    %v1245 = vsel %vm239, %v1241, 0.0
    %1246 = vadd.xlane.f32.xlu0 %v1245
    %v1247 = vpop.xlane.xlu0 %1246
    %v1248 = vrcp.pop %v1244
    %v1249 = vrcp.pop %v1247
    %v1250 = vmul.f32 %v1239, %v1248
    %v1251 = vmul.f32 %v1241, %v1249
    %v1252 = vpack.c.bf16 %v1251, %v1250
    %1253 = vrot.lane.b32.xlu0 %v1175, 64
    %v1254 = vpop.permute.xlu0 %1253
    %v1257 = vsel %vm239, %v1252, 0
    %1259 = vmatprep.subr.bf16.mxu0 0
    %1260 = vmatpush1.bf16.msra.mxu0 %v1254
    %1261 = vmatprep.subr.bf16.mxu0 0
    %1262 = vmatpush1.bf16.msra.mxu0 0
    %1263 = vmatprep.subr.bf16.mxu0 0
    %1264 = vmatpush1.bf16.msra.mxu0 0
    %1265 = vmatprep.subr.bf16.mxu0 0
    %1266 = vmatpush1.bf16.msra.mxu0 0
    %1267 = vmatprep.subr.bf16.mxu0 0
    %1268 = vmatpush1.bf16.msra.mxu0 0
    %1269 = vmatprep.subr.bf16.mxu0 0
    %1270 = vmatpush1.bf16.msra.mxu0 0
    %1271 = vmatprep.subr.bf16.mxu0 0
    %1272 = vmatpush1.bf16.msra.mxu0 0
    %1273 = vmatprep.subr.bf16.mxu0 0
    %1274 = vmatpush1.bf16.msra.mxu0 0
    %1275 = vmatprep.subr.bf16.mxu0 0
    %1276 = vmatpush1.bf16.msra.mxu0 0
    %1277 = vmatprep.subr.bf16.mxu0 0
    %1278 = vmatpush1.bf16.msra.mxu0 0
    %1279 = vmatprep.subr.bf16.mxu0 0
    %1280 = vmatpush1.bf16.msra.mxu0 0
    %1281 = vmatprep.subr.bf16.mxu0 0
    %1282 = vmatpush1.bf16.msra.mxu0 0
    %1283 = vmatprep.subr.bf16.mxu0 0
    %1284 = vmatpush1.bf16.msra.mxu0 0
    %1285 = vmatprep.subr.bf16.mxu0 0
    %1286 = vmatpush1.bf16.msra.mxu0 0
    %1287 = vmatprep.subr.bf16.mxu0 0
    %1288 = vmatpush1.bf16.msra.mxu0 0
    %1289 = vmatprep.subr.bf16.mxu0 0
    %1290 = vmatpush1.bf16.msra.mxu0 0
    %1291 = vmatprep.mubr.bf16.mxu0 0
    %1292 = vmatmul.mubr.bf16.gmra.mrb[0].mxu0 %v1257
    %v1293 = vpop.f32.mrb[0].mxu0
    %v1294 = vadd.f32 0.0, %v1293
    %v1295 = vpop.f32.mrb[0].mxu0
    %v1296 = vpop.f32.mrb[0].mxu0
    %v1297 = vadd.f32 0.0, %v1296
    %v1298 = vpop.f32.mrb[0].mxu0
    %1299 = vdwg.mxu0
    %1300 = vrot.lane.b32.xlu0 %v1175, 120
    %v1301 = vpop.permute.xlu0 %1300
    %1302 = vrot.lane.b32.xlu0 %v1175, 88
    %v1303 = vpop.permute.xlu0 %1302
    %v1305 = vsel %vm185, %v1301, 0
    %v1308 = vsel %vm185, %v1303, 0
    %1310 = vmatprep.subr.bf16.mxu0 0
    %1311 = vmatpush1.bf16.xpose.msra.mxu0 %v1308
    %1312 = vmatprep.subr.bf16.mxu0 0
    %1313 = vmatpush1.bf16.xpose.msra.mxu0 0
    %1314 = vmatprep.subr.bf16.mxu0 0
    %1315 = vmatpush1.bf16.xpose.msra.mxu0 0
    %1316 = vmatprep.subr.bf16.mxu0 0
    %1317 = vmatpush1.bf16.xpose.msra.mxu0 0
    %1318 = vmatprep.subr.bf16.mxu0 0
    %1319 = vmatpush1.bf16.xpose.msra.mxu0 0
    %1320 = vmatprep.subr.bf16.mxu0 0
    %1321 = vmatpush1.bf16.xpose.msra.mxu0 0
    %1322 = vmatprep.subr.bf16.mxu0 0
    %1323 = vmatpush1.bf16.xpose.msra.mxu0 0
    %1324 = vmatprep.subr.bf16.mxu0 0
    %1325 = vmatpush1.bf16.xpose.msra.mxu0 0
    %1326 = vmatprep.subr.bf16.mxu0 0
    %1327 = vmatpush1.bf16.xpose.msra.mxu0 0
    %1328 = vmatprep.subr.bf16.mxu0 0
    %1329 = vmatpush1.bf16.xpose.msra.mxu0 0
    %1330 = vmatprep.subr.bf16.mxu0 0
    %1331 = vmatpush1.bf16.xpose.msra.mxu0 0
    %1332 = vmatprep.subr.bf16.mxu0 0
    %1333 = vmatpush1.bf16.xpose.msra.mxu0 0
    %1334 = vmatprep.subr.bf16.mxu0 0
    %1335 = vmatpush1.bf16.xpose.msra.mxu0 0
    %1336 = vmatprep.subr.bf16.mxu0 0
    %1337 = vmatpush1.bf16.xpose.msra.mxu0 0
    %1338 = vmatprep.subr.bf16.mxu0 0
    %1339 = vmatpush1.bf16.xpose.msra.mxu0 0
    %1340 = vmatprep.subr.bf16.mxu0 0
    %1341 = vmatpush1.bf16.xpose.msra.mxu0 0
    %1342 = vmatprep.mubr.bf16.mxu0 0
    %1343 = vmatmul.mubr.bf16.gmra.mrb[0].mxu0 %v1305
    %v1344 = vpop.f32.mrb[0].mxu0
    %v1345 = vadd.f32 0.0, %v1344
    %v1346 = vpop.f32.mrb[0].mxu0
    %v1347 = vpop.f32.mrb[0].mxu0
    %v1348 = vadd.f32 0.0, %v1347
    %v1349 = vpop.f32.mrb[0].mxu0
    %1350 = vdwg.mxu0
    %v1351 = vmul.f32 %v1345, 0.35355338
    %v1352 = vmul.f32 %v1348, 0.35355338
    %v1353 = vsel %vm235, %v1351, %v51
    %v1354 = vsel %vm236, %v1352, %v52
    %v1355 = vsel %vm239, %v1353, -inf
    %1356 = vmax.xlane.f32.xlu0 %v1355
    %v1357 = vpop.xlane.xlu0 %1356
    %v1358 = vsel %vm239, %v1354, -inf
    %1359 = vmax.xlane.f32.xlu0 %v1358
    %v1360 = vpop.xlane.xlu0 %1359
    %v1361 = vsub.f32 %v1353, %v1357
    %v1362 = vsub.f32 %v1354, %v1360
    %v1363 = vmul.f32 %v1361, 1.442695
    %v1364 = vpow.pop %v1363
    %v1365 = vmul.f32 %v1362, 1.442695
    %v1366 = vpow.pop %v1365
    %v1367 = vsel %vm239, %v1364, 0.0
    %1368 = vadd.xlane.f32.xlu0 %v1367
    %v1369 = vpop.xlane.xlu0 %1368
    %v1370 = vsel %vm239, %v1366, 0.0
    %1371 = vadd.xlane.f32.xlu0 %v1370
    %v1372 = vpop.xlane.xlu0 %1371
    %v1373 = vrcp.pop %v1369
    %v1374 = vrcp.pop %v1372
    %v1375 = vmul.f32 %v1364, %v1373
    %v1376 = vmul.f32 %v1366, %v1374
    %v1377 = vpack.c.bf16 %v1376, %v1375
    %1378 = vrot.lane.b32.xlu0 %v1175, 56
    %v1379 = vpop.permute.xlu0 %1378
    %v1382 = vsel %vm239, %v1377, 0
    %1384 = vmatprep.subr.bf16.mxu0 0
    %1385 = vmatpush1.bf16.msra.mxu0 %v1379
    %1386 = vmatprep.subr.bf16.mxu0 0
    %1387 = vmatpush1.bf16.msra.mxu0 0
    %1388 = vmatprep.subr.bf16.mxu0 0
    %1389 = vmatpush1.bf16.msra.mxu0 0
    %1390 = vmatprep.subr.bf16.mxu0 0
    %1391 = vmatpush1.bf16.msra.mxu0 0
    %1392 = vmatprep.subr.bf16.mxu0 0
    %1393 = vmatpush1.bf16.msra.mxu0 0
    %1394 = vmatprep.subr.bf16.mxu0 0
    %1395 = vmatpush1.bf16.msra.mxu0 0
    %1396 = vmatprep.subr.bf16.mxu0 0
    %1397 = vmatpush1.bf16.msra.mxu0 0
    %1398 = vmatprep.subr.bf16.mxu0 0
    %1399 = vmatpush1.bf16.msra.mxu0 0
    %1400 = vmatprep.subr.bf16.mxu0 0
    %1401 = vmatpush1.bf16.msra.mxu0 0
    %1402 = vmatprep.subr.bf16.mxu0 0
    %1403 = vmatpush1.bf16.msra.mxu0 0
    %1404 = vmatprep.subr.bf16.mxu0 0
    %1405 = vmatpush1.bf16.msra.mxu0 0
    %1406 = vmatprep.subr.bf16.mxu0 0
    %1407 = vmatpush1.bf16.msra.mxu0 0
    %1408 = vmatprep.subr.bf16.mxu0 0
    %1409 = vmatpush1.bf16.msra.mxu0 0
    %1410 = vmatprep.subr.bf16.mxu0 0
    %1411 = vmatpush1.bf16.msra.mxu0 0
    %1412 = vmatprep.subr.bf16.mxu0 0
    %1413 = vmatpush1.bf16.msra.mxu0 0
    %1414 = vmatprep.subr.bf16.mxu0 0
    %1415 = vmatpush1.bf16.msra.mxu0 0
    %1416 = vmatprep.mubr.bf16.mxu0 0
    %1417 = vmatmul.mubr.bf16.gmra.mrb[0].mxu0 %v1382
    %v1418 = vpop.f32.mrb[0].mxu0
    %v1419 = vadd.f32 0.0, %v1418
    %v1420 = vpop.f32.mrb[0].mxu0
    %v1421 = vpop.f32.mrb[0].mxu0
    %v1422 = vadd.f32 0.0, %v1421
    %v1423 = vpop.f32.mrb[0].mxu0
    %1424 = vdwg.mxu0
    %1425 = vrot.lane.b32.xlu0 %v1175, 112
    %v1426 = vpop.permute.xlu0 %1425
    %1427 = vrot.lane.b32.xlu0 %v1175, 80
    %v1428 = vpop.permute.xlu0 %1427
    %v1430 = vsel %vm185, %v1426, 0
    %v1433 = vsel %vm185, %v1428, 0
    %1435 = vmatprep.subr.bf16.mxu0 0
    %1436 = vmatpush1.bf16.xpose.msra.mxu0 %v1433
    %1437 = vmatprep.subr.bf16.mxu0 0
    %1438 = vmatpush1.bf16.xpose.msra.mxu0 0
    %1439 = vmatprep.subr.bf16.mxu0 0
    %1440 = vmatpush1.bf16.xpose.msra.mxu0 0
    %1441 = vmatprep.subr.bf16.mxu0 0
    %1442 = vmatpush1.bf16.xpose.msra.mxu0 0
    %1443 = vmatprep.subr.bf16.mxu0 0
    %1444 = vmatpush1.bf16.xpose.msra.mxu0 0
    %1445 = vmatprep.subr.bf16.mxu0 0
    %1446 = vmatpush1.bf16.xpose.msra.mxu0 0
    %1447 = vmatprep.subr.bf16.mxu0 0
    %1448 = vmatpush1.bf16.xpose.msra.mxu0 0
    %1449 = vmatprep.subr.bf16.mxu0 0
    %1450 = vmatpush1.bf16.xpose.msra.mxu0 0
    %1451 = vmatprep.subr.bf16.mxu0 0
    %1452 = vmatpush1.bf16.xpose.msra.mxu0 0
    %1453 = vmatprep.subr.bf16.mxu0 0
    %1454 = vmatpush1.bf16.xpose.msra.mxu0 0
    %1455 = vmatprep.subr.bf16.mxu0 0
    %1456 = vmatpush1.bf16.xpose.msra.mxu0 0
    %1457 = vmatprep.subr.bf16.mxu0 0
    %1458 = vmatpush1.bf16.xpose.msra.mxu0 0
    %1459 = vmatprep.subr.bf16.mxu0 0
    %1460 = vmatpush1.bf16.xpose.msra.mxu0 0
    %1461 = vmatprep.subr.bf16.mxu0 0
    %1462 = vmatpush1.bf16.xpose.msra.mxu0 0
    %1463 = vmatprep.subr.bf16.mxu0 0
    %1464 = vmatpush1.bf16.xpose.msra.mxu0 0
    %1465 = vmatprep.subr.bf16.mxu0 0
    %1466 = vmatpush1.bf16.xpose.msra.mxu0 0
    %1467 = vmatprep.mubr.bf16.mxu0 0
    %1468 = vmatmul.mubr.bf16.gmra.mrb[0].mxu0 %v1430
    %v1469 = vpop.f32.mrb[0].mxu0
    %v1470 = vadd.f32 0.0, %v1469
    %v1471 = vpop.f32.mrb[0].mxu0
    %v1472 = vpop.f32.mrb[0].mxu0
    %v1473 = vadd.f32 0.0, %v1472
    %v1474 = vpop.f32.mrb[0].mxu0
    %1475 = vdwg.mxu0
    %v1476 = vmul.f32 %v1470, 0.35355338
    %v1477 = vmul.f32 %v1473, 0.35355338
    %v1478 = vsel %vm235, %v1476, %v51
    %v1479 = vsel %vm236, %v1477, %v52
    %v1480 = vsel %vm239, %v1478, -inf
    %1481 = vmax.xlane.f32.xlu0 %v1480
    %v1482 = vpop.xlane.xlu0 %1481
    %v1483 = vsel %vm239, %v1479, -inf
    %1484 = vmax.xlane.f32.xlu0 %v1483
    %v1485 = vpop.xlane.xlu0 %1484
    %v1486 = vsub.f32 %v1478, %v1482
    %v1487 = vsub.f32 %v1479, %v1485
    %v1488 = vmul.f32 %v1486, 1.442695
    %v1489 = vpow.pop %v1488
    %v1490 = vmul.f32 %v1487, 1.442695
    %v1491 = vpow.pop %v1490
    %v1492 = vsel %vm239, %v1489, 0.0
    %1493 = vadd.xlane.f32.xlu0 %v1492
    %v1494 = vpop.xlane.xlu0 %1493
    %v1495 = vsel %vm239, %v1491, 0.0
    %1496 = vadd.xlane.f32.xlu0 %v1495
    %v1497 = vpop.xlane.xlu0 %1496
    %v1498 = vrcp.pop %v1494
    %v1499 = vrcp.pop %v1497
    %v1500 = vmul.f32 %v1489, %v1498
    %v1501 = vmul.f32 %v1491, %v1499
    %v1502 = vpack.c.bf16 %v1501, %v1500
    %1503 = vrot.lane.b32.xlu0 %v1175, 48
    %v1504 = vpop.permute.xlu0 %1503
    %v1507 = vsel %vm239, %v1502, 0
    %1509 = vmatprep.subr.bf16.mxu0 0
    %1510 = vmatpush1.bf16.msra.mxu0 %v1504
    %1511 = vmatprep.subr.bf16.mxu0 0
    %1512 = vmatpush1.bf16.msra.mxu0 0
    %1513 = vmatprep.subr.bf16.mxu0 0
    %1514 = vmatpush1.bf16.msra.mxu0 0
    %1515 = vmatprep.subr.bf16.mxu0 0
    %1516 = vmatpush1.bf16.msra.mxu0 0
    %1517 = vmatprep.subr.bf16.mxu0 0
    %1518 = vmatpush1.bf16.msra.mxu0 0
    %1519 = vmatprep.subr.bf16.mxu0 0
    %1520 = vmatpush1.bf16.msra.mxu0 0
    %1521 = vmatprep.subr.bf16.mxu0 0
    %1522 = vmatpush1.bf16.msra.mxu0 0
    %1523 = vmatprep.subr.bf16.mxu0 0
    %1524 = vmatpush1.bf16.msra.mxu0 0
    %1525 = vmatprep.subr.bf16.mxu0 0
    %1526 = vmatpush1.bf16.msra.mxu0 0
    %1527 = vmatprep.subr.bf16.mxu0 0
    %1528 = vmatpush1.bf16.msra.mxu0 0
    %1529 = vmatprep.subr.bf16.mxu0 0
    %1530 = vmatpush1.bf16.msra.mxu0 0
    %1531 = vmatprep.subr.bf16.mxu0 0
    %1532 = vmatpush1.bf16.msra.mxu0 0
    %1533 = vmatprep.subr.bf16.mxu0 0
    %1534 = vmatpush1.bf16.msra.mxu0 0
    %1535 = vmatprep.subr.bf16.mxu0 0
    %1536 = vmatpush1.bf16.msra.mxu0 0
    %1537 = vmatprep.subr.bf16.mxu0 0
    %1538 = vmatpush1.bf16.msra.mxu0 0
    %1539 = vmatprep.subr.bf16.mxu0 0
    %1540 = vmatpush1.bf16.msra.mxu0 0
    %1541 = vmatprep.mubr.bf16.mxu0 0
    %1542 = vmatmul.mubr.bf16.gmra.mrb[0].mxu0 %v1507
    %v1543 = vpop.f32.mrb[0].mxu0
    %v1544 = vadd.f32 0.0, %v1543
    %v1545 = vpop.f32.mrb[0].mxu0
    %v1546 = vpop.f32.mrb[0].mxu0
    %v1547 = vadd.f32 0.0, %v1546
    %v1548 = vpop.f32.mrb[0].mxu0
    %1549 = vdwg.mxu0
    %1550 = vrot.lane.b32.xlu0 %v1175, 104
    %v1551 = vpop.permute.xlu0 %1550
    %1552 = vrot.lane.b32.xlu0 %v1175, 72
    %v1553 = vpop.permute.xlu0 %1552
    %v1555 = vsel %vm185, %v1551, 0
    %v1558 = vsel %vm185, %v1553, 0
    %1560 = vmatprep.subr.bf16.mxu0 0
    %1561 = vmatpush1.bf16.xpose.msra.mxu0 %v1558
    %1562 = vmatprep.subr.bf16.mxu0 0
    %1563 = vmatpush1.bf16.xpose.msra.mxu0 0
    %1564 = vmatprep.subr.bf16.mxu0 0
    %1565 = vmatpush1.bf16.xpose.msra.mxu0 0
    %1566 = vmatprep.subr.bf16.mxu0 0
    %1567 = vmatpush1.bf16.xpose.msra.mxu0 0
    %1568 = vmatprep.subr.bf16.mxu0 0
    %1569 = vmatpush1.bf16.xpose.msra.mxu0 0
    %1570 = vmatprep.subr.bf16.mxu0 0
    %1571 = vmatpush1.bf16.xpose.msra.mxu0 0
    %1572 = vmatprep.subr.bf16.mxu0 0
    %1573 = vmatpush1.bf16.xpose.msra.mxu0 0
    %1574 = vmatprep.subr.bf16.mxu0 0
    %1575 = vmatpush1.bf16.xpose.msra.mxu0 0
    %1576 = vmatprep.subr.bf16.mxu0 0
    %1577 = vmatpush1.bf16.xpose.msra.mxu0 0
    %1578 = vmatprep.subr.bf16.mxu0 0
    %1579 = vmatpush1.bf16.xpose.msra.mxu0 0
    %1580 = vmatprep.subr.bf16.mxu0 0
    %1581 = vmatpush1.bf16.xpose.msra.mxu0 0
    %1582 = vmatprep.subr.bf16.mxu0 0
    %1583 = vmatpush1.bf16.xpose.msra.mxu0 0
    %1584 = vmatprep.subr.bf16.mxu0 0
    %1585 = vmatpush1.bf16.xpose.msra.mxu0 0
    %1586 = vmatprep.subr.bf16.mxu0 0
    %1587 = vmatpush1.bf16.xpose.msra.mxu0 0
    %1588 = vmatprep.subr.bf16.mxu0 0
    %1589 = vmatpush1.bf16.xpose.msra.mxu0 0
    %1590 = vmatprep.subr.bf16.mxu0 0
    %1591 = vmatpush1.bf16.xpose.msra.mxu0 0
    %1592 = vmatprep.mubr.bf16.mxu0 0
    %1593 = vmatmul.mubr.bf16.gmra.mrb[0].mxu0 %v1555
    %v1594 = vpop.f32.mrb[0].mxu0
    %v1595 = vadd.f32 0.0, %v1594
    %v1596 = vpop.f32.mrb[0].mxu0
    %v1597 = vpop.f32.mrb[0].mxu0
    %v1598 = vadd.f32 0.0, %v1597
    %v1599 = vpop.f32.mrb[0].mxu0
    %1600 = vdwg.mxu0
    %v1601 = vmul.f32 %v1595, 0.35355338
    %v1602 = vmul.f32 %v1598, 0.35355338
    %v1603 = vsel %vm235, %v1601, %v51
    %v1604 = vsel %vm236, %v1602, %v52
    %v1605 = vsel %vm239, %v1603, -inf
    %1606 = vmax.xlane.f32.xlu0 %v1605
    %v1607 = vpop.xlane.xlu0 %1606
    %v1608 = vsel %vm239, %v1604, -inf
    %1609 = vmax.xlane.f32.xlu0 %v1608
    %v1610 = vpop.xlane.xlu0 %1609
    %v1611 = vsub.f32 %v1603, %v1607
    %v1612 = vsub.f32 %v1604, %v1610
    %v1613 = vmul.f32 %v1611, 1.442695
    %v1614 = vpow.pop %v1613
    %v1615 = vmul.f32 %v1612, 1.442695
    %v1616 = vpow.pop %v1615
    %v1617 = vsel %vm239, %v1614, 0.0
    %1618 = vadd.xlane.f32.xlu0 %v1617
    %v1619 = vpop.xlane.xlu0 %1618
    %v1620 = vsel %vm239, %v1616, 0.0
    %1621 = vadd.xlane.f32.xlu0 %v1620
    %v1622 = vpop.xlane.xlu0 %1621
    %v1623 = vrcp.pop %v1619
    %v1624 = vrcp.pop %v1622
    %v1625 = vmul.f32 %v1614, %v1623
    %v1626 = vmul.f32 %v1616, %v1624
    %v1627 = vpack.c.bf16 %v1626, %v1625
    %1628 = vrot.lane.b32.xlu0 %v1175, 40
    %v1629 = vpop.permute.xlu0 %1628
    %v1632 = vsel %vm239, %v1627, 0
    %1634 = vmatprep.subr.bf16.mxu0 0
    %1635 = vmatpush1.bf16.msra.mxu0 %v1629
    %1636 = vmatprep.subr.bf16.mxu0 0
    %1637 = vmatpush1.bf16.msra.mxu0 0
    %1638 = vmatprep.subr.bf16.mxu0 0
    %1639 = vmatpush1.bf16.msra.mxu0 0
    %1640 = vmatprep.subr.bf16.mxu0 0
    %1641 = vmatpush1.bf16.msra.mxu0 0
    %1642 = vmatprep.subr.bf16.mxu0 0
    %1643 = vmatpush1.bf16.msra.mxu0 0
    %1644 = vmatprep.subr.bf16.mxu0 0
    %1645 = vmatpush1.bf16.msra.mxu0 0
    %1646 = vmatprep.subr.bf16.mxu0 0
    %1647 = vmatpush1.bf16.msra.mxu0 0
    %1648 = vmatprep.subr.bf16.mxu0 0
    %1649 = vmatpush1.bf16.msra.mxu0 0
    %1650 = vmatprep.subr.bf16.mxu0 0
    %1651 = vmatpush1.bf16.msra.mxu0 0
    %1652 = vmatprep.subr.bf16.mxu0 0
    %1653 = vmatpush1.bf16.msra.mxu0 0
    %1654 = vmatprep.subr.bf16.mxu0 0
    %1655 = vmatpush1.bf16.msra.mxu0 0
    %1656 = vmatprep.subr.bf16.mxu0 0
    %1657 = vmatpush1.bf16.msra.mxu0 0
    %1658 = vmatprep.subr.bf16.mxu0 0
    %1659 = vmatpush1.bf16.msra.mxu0 0
    %1660 = vmatprep.subr.bf16.mxu0 0
    %1661 = vmatpush1.bf16.msra.mxu0 0
    %1662 = vmatprep.subr.bf16.mxu0 0
    %1663 = vmatpush1.bf16.msra.mxu0 0
    %1664 = vmatprep.subr.bf16.mxu0 0
    %1665 = vmatpush1.bf16.msra.mxu0 0
    %1666 = vmatprep.mubr.bf16.mxu0 0
    %1667 = vmatmul.mubr.bf16.gmra.mrb[0].mxu0 %v1632
    %v1668 = vpop.f32.mrb[0].mxu0
    %v1669 = vadd.f32 0.0, %v1668
    %v1670 = vpop.f32.mrb[0].mxu0
    %v1671 = vpop.f32.mrb[0].mxu0
    %v1672 = vadd.f32 0.0, %v1671
    %v1673 = vpop.f32.mrb[0].mxu0
    %1674 = vdwg.mxu0
    %1677 = vrot.lane.b32.xlu0 %v1419, 8
    %v1678 = vpop.permute.xlu0 %1677
    %1679 = vrot.lane.b32.xlu0 %v1422, 8
    %v1680 = vpop.permute.xlu0 %1679
    %1685 = vrot.lane.b32.xlu0 %v1544, 16
    %v1686 = vpop.permute.xlu0 %1685
    %1687 = vrot.lane.b32.xlu0 %v1547, 16
    %v1688 = vpop.permute.xlu0 %1687
    %1693 = vrot.lane.b32.xlu0 %v1669, 24
    %v1694 = vpop.permute.xlu0 %1693
    %1695 = vrot.lane.b32.xlu0 %v1672, 24
    %v1696 = vpop.permute.xlu0 %1695
    %v1699 = vsel %vm185, %v1294, %v1678
    %v1700 = vsel %vm185, %v1297, %v1680
    %v1701 = vsel %vm239, %v1699, %v1686
    %v1702 = vsel %vm239, %v1700, %v1688
    %v1703 = vsel %vm713, %v1701, %v1694
    %v1704 = vsel %vm713, %v1702, %v1696
    %v1705 = vpack.c.bf16 %v1704, %v1703
    %s1706 = scalar_lea.vmem %s6, 16
    %v1707 = vld [vmem:[%s1706] sm:$0xf]
    %v1708 = vld [vmem:[%s1706 + $0x4] sm:$0xf]
    %v1709 = vld [vmem:[%s1706 + $0x8] sm:$0xf]
    %v1710 = vld [vmem:[%s1706 + $0xc] sm:$0xf]
    %s1711 = scalar_lea.vmem %s7, 1
    %v1712 = vld [vmem:[%s1711] sm:$0x1]
    %v1714 = vlaneseq
    %v1715 = vshrl.u32 %v1714, 7
    %v1716 = vsub.s32 0, %v1715
    %v1717 = vrot.slane %v1712, %v1716
    %v1723 = vunpack.c.l.b16 %v1707
    %v1724 = vunpack.c.l.b16 %v1708
    %v1725 = vunpack.c.l.b16 %v1709
    %v1726 = vunpack.c.l.b16 %v1710
    %v1727 = vpack.c.b16 %v1724, %v1723
    %v1728 = vpack.c.b16 %v1726, %v1725
    %v1732 = vsel %vm55, %v1705, 0
    %1734 = vmatprep.subr.bf16.mxu0 0
    %1735 = vmatpush1.bf16.msra.mxu0 %v1727
    %1736 = vmatprep.subr.bf16.mxu0 0
    %1737 = vmatpush1.bf16.msra.mxu0 %v1728
    %1738 = vmatprep.subr.bf16.mxu0 0
    %1739 = vmatpush1.bf16.msra.mxu0 0
    %1740 = vmatprep.subr.bf16.mxu0 0
    %1741 = vmatpush1.bf16.msra.mxu0 0
    %1742 = vmatprep.subr.bf16.mxu0 0
    %1743 = vmatpush1.bf16.msra.mxu0 0
    %1744 = vmatprep.subr.bf16.mxu0 0
    %1745 = vmatpush1.bf16.msra.mxu0 0
    %1746 = vmatprep.subr.bf16.mxu0 0
    %1747 = vmatpush1.bf16.msra.mxu0 0
    %1748 = vmatprep.subr.bf16.mxu0 0
    %1749 = vmatpush1.bf16.msra.mxu0 0
    %1750 = vmatprep.subr.bf16.mxu0 0
    %1751 = vmatpush1.bf16.msra.mxu0 0
    %1752 = vmatprep.subr.bf16.mxu0 0
    %1753 = vmatpush1.bf16.msra.mxu0 0
    %1754 = vmatprep.subr.bf16.mxu0 0
    %1755 = vmatpush1.bf16.msra.mxu0 0
    %1756 = vmatprep.subr.bf16.mxu0 0
    %1757 = vmatpush1.bf16.msra.mxu0 0
    %1758 = vmatprep.subr.bf16.mxu0 0
    %1759 = vmatpush1.bf16.msra.mxu0 0
    %1760 = vmatprep.subr.bf16.mxu0 0
    %1761 = vmatpush1.bf16.msra.mxu0 0
    %1762 = vmatprep.subr.bf16.mxu0 0
    %1763 = vmatpush1.bf16.msra.mxu0 0
    %1764 = vmatprep.subr.bf16.mxu0 0
    %1765 = vmatpush1.bf16.msra.mxu0 0
    %1766 = vmatprep.mubr.bf16.mxu0 0
    %1767 = vmatmul.mubr.bf16.gmra.mrb[0].mxu0 %v1732
    %v1768 = vpop.f32.mrb[0].mxu0
    %v1769 = vadd.f32 %v1717, %v1768
    %v1770 = vpop.f32.mrb[0].mxu0
    %v1771 = vpop.f32.mrb[0].mxu0
    %v1772 = vadd.f32 %v1717, %v1771
    %v1773 = vpop.f32.mrb[0].mxu0
    %1774 = vdwg.mxu0
    %v1775 = vadd.f32 %v1043, %v1769
    %v1776 = vadd.f32 %v1044, %v1772
    %s1777 = scalar_lea.vmem %s8, 1
    %v1778 = vld [vmem:[%s1777] sm:$0x1]
    %s1779 = scalar_lea.vmem %s9, 1
    %v1780 = vld [vmem:[%s1779] sm:$0x1]
    %v1781 = vsel %vm55, %v1775, 0.0
    %1782 = vadd.xlane.f32.xlu0 %v1781
    %v1783 = vpop.xlane.xlu0 %1782
    %v1784 = vsel %vm55, %v1776, 0.0
    %1785 = vadd.xlane.f32.xlu0 %v1784
    %v1786 = vpop.xlane.xlu0 %1785
    %v1787 = vmul.f32 %v1783, %v62
    %v1788 = vmul.f32 %v1786, %v62
    %v1789 = vsub.f32 %v1775, %v1787
    %v1790 = vsub.f32 %v1776, %v1788
    %v1791 = vmul.f32 %v1789, %v1789
    %v1792 = vmul.f32 %v1790, %v1790
    %v1793 = vsel %vm55, %v1791, 0.0
    %1794 = vadd.xlane.f32.xlu0 %v1793
    %v1795 = vpop.xlane.xlu0 %1794
    %v1796 = vsel %vm55, %v1792, 0.0
    %1797 = vadd.xlane.f32.xlu0 %v1796
    %v1798 = vpop.xlane.xlu0 %1797
    %v1799 = vmul.f32 %v1795, 0.032258064
    %v1800 = vmul.f32 %v1798, 0.032258064
    %v1801 = vrsqrt.pop %v1799
    %v1802 = vmul.f32 %v1799, %v1801
    %vm1803 = vcmp.eq.f32.partialorder %v1799, inf
    %v1804 = vsel %vm1803, %v1799, %v1802
    %vm1805 = vcmp.eq.f32.partialorder %v1799, 0.0
    %v1806 = vand.u32 %v1799, 2147483648
    %v1807 = vsel %vm1805, %v1806, %v1804
    %v1808 = vrsqrt.pop %v1800
    %v1809 = vmul.f32 %v1800, %v1808
    %vm1810 = vcmp.eq.f32.partialorder %v1800, inf
    %v1811 = vsel %vm1810, %v1800, %v1809
    %vm1812 = vcmp.eq.f32.partialorder %v1800, 0.0
    %v1813 = vand.u32 %v1800, 2147483648
    %v1814 = vsel %vm1812, %v1813, %v1811
    %v1815 = vadd.f32 %v1807, 1e-06
    %v1816 = vadd.f32 %v1814, 1e-06
    %v1817 = vrcp.pop %v1815
    %v1818 = vrcp.pop %v1816
    %v1820 = vlaneseq
    %v1821 = vshrl.u32 %v1820, 7
    %v1822 = vsub.s32 0, %v1821
    %v1823 = vrot.slane %v1778, %v1822
    %v1825 = vmul.f32 %v1823, %v1789
    %v1826 = vmul.f32 %v1823, %v1790
    %v1827 = vmul.f32 %v1825, %v1817
    %v1828 = vmul.f32 %v1826, %v1818
    %v1830 = vlaneseq
    %v1831 = vshrl.u32 %v1830, 7
    %v1832 = vsub.s32 0, %v1831
    %v1833 = vrot.slane %v1780, %v1832
    %v1835 = vadd.f32 %v1827, %v1833
    %v1836 = vadd.f32 %v1828, %v1833
    %v1837 = vpack.c.bf16 %v1836, %v1835
    %s1838 = scalar_lea.vmem %s10, 16
    %v1839 = vld [vmem:[%s1838] sm:$0xf]
    %v1840 = vld [vmem:[%s1838 + $0x4] sm:$0xf]
    %v1841 = vld [vmem:[%s1838 + $0x8] sm:$0xf]
    %v1842 = vld [vmem:[%s1838 + $0xc] sm:$0xf]
    %s1843 = scalar_lea.vmem %s11, 1
    %v1844 = vld [vmem:[%s1843] sm:$0x1]
    %v1846 = vlaneseq
    %v1847 = vshrl.u32 %v1846, 7
    %v1848 = vsub.s32 0, %v1847
    %v1849 = vrot.slane %v1844, %v1848
    %v1855 = vunpack.c.l.b16 %v1839
    %v1856 = vunpack.c.l.b16 %v1840
    %v1857 = vunpack.c.l.b16 %v1841
    %v1858 = vunpack.c.l.b16 %v1842
    %v1859 = vpack.c.b16 %v1856, %v1855
    %v1860 = vpack.c.b16 %v1858, %v1857
    %v1864 = vsel %vm55, %v1837, 0
    %1866 = vmatprep.subr.bf16.mxu0 0
    %1867 = vmatpush1.bf16.msra.mxu0 %v1859
    %1868 = vmatprep.subr.bf16.mxu0 0
    %1869 = vmatpush1.bf16.msra.mxu0 %v1860
    %1870 = vmatprep.subr.bf16.mxu0 0
    %1871 = vmatpush1.bf16.msra.mxu0 0
    %1872 = vmatprep.subr.bf16.mxu0 0
    %1873 = vmatpush1.bf16.msra.mxu0 0
    %1874 = vmatprep.subr.bf16.mxu0 0
    %1875 = vmatpush1.bf16.msra.mxu0 0
    %1876 = vmatprep.subr.bf16.mxu0 0
    %1877 = vmatpush1.bf16.msra.mxu0 0
    %1878 = vmatprep.subr.bf16.mxu0 0
    %1879 = vmatpush1.bf16.msra.mxu0 0
    %1880 = vmatprep.subr.bf16.mxu0 0
    %1881 = vmatpush1.bf16.msra.mxu0 0
    %1882 = vmatprep.subr.bf16.mxu0 0
    %1883 = vmatpush1.bf16.msra.mxu0 0
    %1884 = vmatprep.subr.bf16.mxu0 0
    %1885 = vmatpush1.bf16.msra.mxu0 0
    %1886 = vmatprep.subr.bf16.mxu0 0
    %1887 = vmatpush1.bf16.msra.mxu0 0
    %1888 = vmatprep.subr.bf16.mxu0 0
    %1889 = vmatpush1.bf16.msra.mxu0 0
    %1890 = vmatprep.subr.bf16.mxu0 0
    %1891 = vmatpush1.bf16.msra.mxu0 0
    %1892 = vmatprep.subr.bf16.mxu0 0
    %1893 = vmatpush1.bf16.msra.mxu0 0
    %1894 = vmatprep.subr.bf16.mxu0 0
    %1895 = vmatpush1.bf16.msra.mxu0 0
    %1896 = vmatprep.subr.bf16.mxu0 0
    %1897 = vmatpush1.bf16.msra.mxu0 0
    %1898 = vmatprep.mubr.bf16.mxu0 0
    %1899 = vmatmul.mubr.bf16.gmra.mrb[0].mxu0 %v1864
    %v1900 = vpop.f32.mrb[0].mxu0
    %v1901 = vadd.f32 %v1849, %v1900
    %v1902 = vpop.f32.mrb[0].mxu0
    %v1903 = vpop.f32.mrb[0].mxu0
    %v1904 = vadd.f32 %v1849, %v1903
    %v1905 = vpop.f32.mrb[0].mxu0
    %1906 = vdwg.mxu0
    %v1907 = vmul.f32 %v1901, 0.5
    %v1908 = vmul.f32 %v1904, 0.5
    %v1909 = vmul.f32 %v1901, 0.044715
    %v1910 = vmul.f32 %v1904, 0.044715
    %v1911 = vmul.f32 %v1909, %v1901
    %v1912 = vmul.f32 %v1910, %v1904
    %v1913 = vmul.f32 %v1911, %v1901
    %v1914 = vmul.f32 %v1912, %v1904
    %v1915 = vadd.f32 %v1901, %v1913
    %v1916 = vadd.f32 %v1904, %v1914
    %v1917 = vmul.f32 %v1915, 0.7978846
    %v1918 = vmul.f32 %v1916, 0.7978846
    %v1919 = vtanh.pop %v1917
    %v1920 = vtanh.pop %v1918
    %v1921 = vadd.f32 %v1919, 1.0
    %v1922 = vadd.f32 %v1920, 1.0
    %v1923 = vmul.f32 %v1907, %v1921
    %v1924 = vmul.f32 %v1908, %v1922
    %v1925 = vpack.c.bf16 %v1924, %v1923
    %s1926 = scalar_lea.vmem %s12, 64
    %v1927 = vld [vmem:[%s1926] sm:$0xf]
    %v1928 = vld [vmem:[%s1926 + $0x4] sm:$0xf]
    %v1929 = vld [vmem:[%s1926 + $0x8] sm:$0xf]
    %v1930 = vld [vmem:[%s1926 + $0xc] sm:$0xf]
    %v1931 = vld [vmem:[%s1926 + $0x10] sm:$0xf]
    %v1932 = vld [vmem:[%s1926 + $0x14] sm:$0xf]
    %v1933 = vld [vmem:[%s1926 + $0x18] sm:$0xf]
    %v1934 = vld [vmem:[%s1926 + $0x1c] sm:$0xf]
    %v1935 = vld [vmem:[%s1926 + $0x20] sm:$0xf]
    %v1936 = vld [vmem:[%s1926 + $0x24] sm:$0xf]
    %v1937 = vld [vmem:[%s1926 + $0x28] sm:$0xf]
    %v1938 = vld [vmem:[%s1926 + $0x2c] sm:$0xf]
    %v1939 = vld [vmem:[%s1926 + $0x30] sm:$0xf]
    %v1940 = vld [vmem:[%s1926 + $0x34] sm:$0xf]
    %v1941 = vld [vmem:[%s1926 + $0x38] sm:$0xf]
    %v1942 = vld [vmem:[%s1926 + $0x3c] sm:$0xf]
    %s1943 = scalar_lea.vmem %s13, 1
    %v1944 = vld [vmem:[%s1943] sm:$0x1]
    %v1946 = vlaneseq
    %v1947 = vshrl.u32 %v1946, 7
    %v1948 = vsub.s32 0, %v1947
    %v1949 = vrot.slane %v1944, %v1948
    %v1967 = vunpack.c.l.b16 %v1927
    %v1968 = vunpack.c.l.b16 %v1928
    %v1969 = vunpack.c.l.b16 %v1929
    %v1970 = vunpack.c.l.b16 %v1930
    %v1971 = vunpack.c.l.b16 %v1931
    %v1972 = vunpack.c.l.b16 %v1932
    %v1973 = vunpack.c.l.b16 %v1933
    %v1974 = vunpack.c.l.b16 %v1934
    %v1975 = vunpack.c.l.b16 %v1935
    %v1976 = vunpack.c.l.b16 %v1936
    %v1977 = vunpack.c.l.b16 %v1937
    %v1978 = vunpack.c.l.b16 %v1938
    %v1979 = vunpack.c.l.b16 %v1939
    %v1980 = vunpack.c.l.b16 %v1940
    %v1981 = vunpack.c.l.b16 %v1941
    %v1982 = vunpack.c.l.b16 %v1942
    %v1983 = vpack.c.b16 %v1968, %v1967
    %v1984 = vpack.c.b16 %v1970, %v1969
    %v1985 = vpack.c.b16 %v1972, %v1971
    %v1986 = vpack.c.b16 %v1974, %v1973
    %v1987 = vpack.c.b16 %v1976, %v1975
    %v1988 = vpack.c.b16 %v1978, %v1977
    %v1989 = vpack.c.b16 %v1980, %v1979
    %v1990 = vpack.c.b16 %v1982, %v1981
    %1999 = vmatprep.subr.bf16.mxu0 0
    %2000 = vmatpush1.bf16.msra.mxu0 %v1983
    %2001 = vmatprep.subr.bf16.mxu0 0
    %2002 = vmatpush1.bf16.msra.mxu0 %v1984
    %2003 = vmatprep.subr.bf16.mxu0 0
    %2004 = vmatpush1.bf16.msra.mxu0 %v1985
    %2005 = vmatprep.subr.bf16.mxu0 0
    %2006 = vmatpush1.bf16.msra.mxu0 %v1986
    %2007 = vmatprep.subr.bf16.mxu0 0
    %2008 = vmatpush1.bf16.msra.mxu0 %v1987
    %2009 = vmatprep.subr.bf16.mxu0 0
    %2010 = vmatpush1.bf16.msra.mxu0 %v1988
    %2011 = vmatprep.subr.bf16.mxu0 0
    %2012 = vmatpush1.bf16.msra.mxu0 %v1989
    %2013 = vmatprep.subr.bf16.mxu0 0
    %2014 = vmatpush1.bf16.msra.mxu0 %v1990
    %2015 = vmatprep.subr.bf16.mxu0 0
    %2016 = vmatpush1.bf16.msra.mxu0 0
    %2017 = vmatprep.subr.bf16.mxu0 0
    %2018 = vmatpush1.bf16.msra.mxu0 0
    %2019 = vmatprep.subr.bf16.mxu0 0
    %2020 = vmatpush1.bf16.msra.mxu0 0
    %2021 = vmatprep.subr.bf16.mxu0 0
    %2022 = vmatpush1.bf16.msra.mxu0 0
    %2023 = vmatprep.subr.bf16.mxu0 0
    %2024 = vmatpush1.bf16.msra.mxu0 0
    %2025 = vmatprep.subr.bf16.mxu0 0
    %2026 = vmatpush1.bf16.msra.mxu0 0
    %2027 = vmatprep.subr.bf16.mxu0 0
    %2028 = vmatpush1.bf16.msra.mxu0 0
    %2029 = vmatprep.subr.bf16.mxu0 0
    %2030 = vmatpush1.bf16.msra.mxu0 0
    %2031 = vmatprep.mubr.bf16.mxu0 0
    %2032 = vmatmul.mubr.bf16.gmra.mrb[0].mxu0 %v1925
    %v2033 = vpop.f32.mrb[0].mxu0
    %v2034 = vadd.f32 %v1949, %v2033
    %v2035 = vpop.f32.mrb[0].mxu0
    %v2036 = vpop.f32.mrb[0].mxu0
    %v2037 = vadd.f32 %v1949, %v2036
    %v2038 = vpop.f32.mrb[0].mxu0
    %2039 = vdwg.mxu0
    %v2040 = vadd.f32 %v1775, %v2034
    %v2041 = vadd.f32 %v1776, %v2037
    %2042 = vst.msk [vmem:[#allocation2] sm:$0xff] %vm55, %v2040
    %2043 = vst.msk [vmem:[#allocation2 + $0x8] sm:$0xff] %vm55, %v2041
    // Predicated region
    $region58: #{context_encoder_forward.1} parent=1 // pred_check
      _
    $region59: #{context_encoder_forward.1} parent=1 // pred_check_branch
      %2045 = sbr.rel (0) target = $region61
    $region60: #{context_encoder_forward.1} parent=1 // pred_region
      %s2047 = ssub.s32 256, 256
      %2048 = vsyncadd [#allocation3], %s2047
      %s2049 = sshll.u32 [#allocation2], 4
      %s2050 = int_to_ptr.vmem [resolvable:$true] %s2049
      %2055 = dma.vmem_to_hbm [thread:$0]  %s2050, 256, %s14, [#allocation3], 128, 128, 8
    $region61: #{context_encoder_forward.1} parent=1 // pred_fallthru
      _
    // Predicated region
    $region62: #{context_encoder_forward.1} parent=1 // pred_check
      _
    $region63: #{context_encoder_forward.1} parent=1 // pred_check_branch
      %2057 = sbr.rel (0) target = $region65
    $region64: #{context_encoder_forward.1} parent=1 // pred_region
      %2058 = dma.done [#allocation3], 256
    $region65: #{context_encoder_forward.1} parent=1 // pred_fallthru
      _
    %2059 = vsyncpa [#allocation3], 1

</llo_original>
